<compile_context>
chip_gen: v7x
topology: tpu7x:2x2x1
jax: 0.10.0
libtpu: 0.0.40
codegen_flags: <defaults>
</compile_context>

<pallas_src>
import functools
import math

import jax
import jax.numpy as jnp
from jax.experimental import pallas as pl
from jax.experimental.pallas import tpu as pltpu


_SQRT_HALF = 0.7071067811865476
# Per-step Python unroll bound for the per-batch matmul loop inside the kernel.
# TODO(synk): for very large B with tiny N*F, switch to lax.fori_loop so bigger
# batch blocks don't blow up code size / compile time.
_MAX_BATCH_BLOCK = 32


def _erf(x):
    # Abramowitz & Stegun 7.1.26 rational approximation, |err| <= 1.5e-7.
    # The divide goes through the EUP (pl.reciprocal) so it does not occupy the
    # VALU slots; exp is EUP as well.
    a1, a2, a3 = 0.254829592, -0.284496736, 1.421413741
    a4, a5, p = -1.453152027, 1.061405429, 0.3275911
    ax = jnp.abs(x)
    t = pl.reciprocal(1.0 + p * ax, approx=True)
    poly = ((((a5 * t + a4) * t + a3) * t + a2) * t + a1) * t
    y = 1.0 - poly * jnp.exp(-(ax * ax))
    return jnp.where(x < 0, -y, y)


def _gelu_exact(x):
    # Exact (erf-based) GELU, matching PyTorch nn.GELU() default.
    return 0.5 * x * (1.0 + _erf(x * _SQRT_HALF))


def _project_readout_kernel(x_ref, w1t_ref, cls_ref, o_ref, *,
                            start_index, fold_output, compute_dtype):
    # x_ref:   (bb, N, F)   tokens incl. CLS row, native dtype
    # w1t_ref: (F, F)       W1^T (token half of the Linear), MXU dtype
    # cls_ref: (bb, 1, F)   f32: x[:, 0] @ W2^T + b, precomputed in the wrapper
    # o_ref:   (bb, 1, T*F) lane-dense folded slab, or (bb, T, F)
    bb, n, f = x_ref.shape
    t = n - start_index
    w1t = w1t_ref[...]                               # resident (F, F) MXU operand
    for b in range(bb):                              # static unroll over the batch block
        # Full-slab matmul (all N rows): avoids a misaligned start_index slice
        # of x; the extra CLS row of MXU work is negligible and is dropped at
        # the store below.
        xb = x_ref[b].astype(compute_dtype)          # (N, F)
        acc = jnp.dot(xb, w1t, preferred_element_type=jnp.float32)   # (N, F) f32
        y = _gelu_exact(acc + cls_ref[b])            # (N, F) + (1, F) broadcast
        y = y[start_index:, :].astype(o_ref.dtype)   # (T, F): drop the CLS row
        if fold_output:
            # Fold (T, F) -> (1, T*F): a single relayout that also absorbs the
            # start_index exclusion; the store itself is an unmasked,
            # lane-dense vst (last dim a multiple of 128).
            o_ref[b] = y.reshape(1, t * f)
        else:
            # TODO(synk): when F % 128 != 0 and T*F % 128 != 0 the store stays
            # lane-masked; absorbing start_index in the input DMA (pl.Element /
            # manual copy) would be the next step for such shapes.
            o_ref[b] = y


def _tpu_vmem_and_cores():
    """Physical VMEM bytes per TensorCore and TensorCores sharing the grid."""
    vmem_bytes = 128 << 20                          # v5e / v6e physical VMEM
    try:
        info = pltpu.get_tpu_info()
        vmem_bytes = int(getattr(info, "vmem_capacity_bytes", vmem_bytes))
    except Exception:                               # non-TPU backend / old runtime
        pass
    try:
        kind = jax.devices()[0].device_kind.lower()
    except Exception:
        kind = ""
    n_cores = 1
    if ("v7" in kind) or ("tpu7" in kind) or ("v4" in kind) or ("v5p" in kind):
        n_cores = 2                                 # 2 TCs share "parallel" grid axes
    if ("v7" in kind) or ("tpu7" in kind):
        vmem_bytes = min(vmem_bytes, 64 << 20)      # v7x: 64 MiB per TensorCore
    return vmem_bytes, n_cores


def _pick_batch_block(batch, per_batch_bytes, block_budget, n_cores):
    """Largest batch block (<= _MAX_BATCH_BLOCK) whose double-buffered in/out
    blocks fit `block_budget`.  Prefers exact divisors of `batch`; on multi-TC
    chips keeps the grid length a multiple of n_cores so the "parallel" batch
    axis splits evenly across TensorCores."""
    cap = max(1, min(batch, _MAX_BATCH_BLOCK,
                     block_budget // max(per_batch_bytes, 1)))
    divisors = [bb for bb in range(cap, 0, -1) if batch % bb == 0]
    non_divisors = [bb for bb in range(cap, 0, -1) if batch % bb != 0]
    for bb in divisors + non_divisors:
        steps = pl.cdiv(batch, bb)
        if n_cores == 1 or steps % n_cores == 0:
            return bb
    return 1


class ProjectReadout:
    """Pallas-TPU equivalent of the PyTorch ProjectReadout module."""

    def __init__(self, in_features, start_index=1, *, key, dtype=jnp.float32,
                 mxu_dtype=jnp.bfloat16):
        self.in_features = in_features
        self.start_index = start_index
        self.compute_dtype = jnp.dtype(mxu_dtype)
        kw, kb = jax.random.split(key)
        bound = 1.0 / math.sqrt(2 * in_features)      # PyTorch Linear init
        self.w = jax.random.uniform(kw, (in_features, 2 * in_features), dtype,
                                    -bound, bound)    # (F, 2F) PyTorch layout
        self.b = jax.random.uniform(kb, (in_features,), dtype, -bound, bound)
        # W = [W1 | W2]:  out = tokens @ W1^T + cls @ W2^T + b.
        # Only W1^T ships to the kernel, pre-cast once to the MXU dtype; the
        # kernel accumulates in f32 via preferred_element_type.
        self.w1t_mxu = jnp.asarray(
            self.w[:, :in_features].T).astype(self.compute_dtype)     # (F, F)
        # CLS half + bias stay f32 (tiny wrapper GEMM) so the bias is never
        # rounded to a narrow activation dtype.
        self.w2t_f32 = jnp.asarray(self.w[:, in_features:].T).astype(jnp.float32)
        self.b_f32 = self.b.astype(jnp.float32)
        self._good_cfg = None                         # cached (fold, single_buffer_w)

    def __call__(self, x):
        # x: (B, N, F)  ->  (B, N - start_index, F)
        B, N, F = x.shape
        assert F == self.in_features
        T = N - self.start_index
        assert T >= 1

        # Hoisted CLS/readout term: one tiny (B,F)x(F,F) f32 GEMM per call.
        cls_proj = (jnp.dot(x[:, 0, :].astype(jnp.float32), self.w2t_f32,
                            precision=jax.lax.Precision.HIGHEST)
                    + self.b_f32).reshape(B, 1, F)

        # --- per-generation block sizing --------------------------------------
        vmem_bytes, n_cores = _tpu_vmem_and_cores()
        x_it = jnp.dtype(x.dtype).itemsize
        w_it = self.compute_dtype.itemsize
        per_batch_bytes = 2 * (N * F * x_it + T * F * x_it + F * 4)  # dbl-buffered blocks
        weight_bytes = F * F * w_it
        block_budget = max(4 << 20, int(vmem_bytes * 0.55) - 2 * weight_bytes)
        bb = _pick_batch_block(B, per_batch_bytes, block_budget, n_cores)
        footprint = bb * per_batch_bytes + 2 * weight_bytes + (4 << 20)
        vmem_limit = int(min(vmem_bytes * 7 // 8, max(32 << 20, footprint)))

        # Lane-dense folded output only helps when F itself is not a lane
        # multiple but T*F is.
        fold_allowed = (F % 128 != 0) and (T * F) % 128 == 0
        candidates = [(fold, buf1)
                      for fold in ((True, False) if fold_allowed else (False,))
                      for buf1 in (True, False)]
        if self._good_cfg in candidates:
            candidates = [self._good_cfg]

        last_err = None
        for fold_output, single_buffer_w in candidates:
            try:
                out = self._run(x, cls_proj, bb=bb, vmem_limit=vmem_limit,
                                fold_output=fold_output,
                                single_buffer_w=single_buffer_w)
            except Exception as err:   # config ladder: retry with a safer variant
                last_err = err
                continue
            self._good_cfg = (fold_output, single_buffer_w)
            return out
        raise last_err

    def _run(self, x, cls_proj, *, bb, vmem_limit, fold_output, single_buffer_w):
        B, N, F = x.shape
        T = N - self.start_index
        grid = (pl.cdiv(B, bb),)

        kernel = functools.partial(
            _project_readout_kernel,
            start_index=self.start_index,
            fold_output=fold_output,
            compute_dtype=self.compute_dtype,
        )

        # Constant-index weight block: single-buffered when supported so its
        # VMEM goes toward a larger batch block instead.
        w_kwargs = {"pipeline_mode": pl.Buffered(1)} if single_buffer_w else {}
        in_specs = [
            pl.BlockSpec((bb, N, F), lambda i: (i, 0, 0)),
            pl.BlockSpec((F, F), lambda i: (0, 0), **w_kwargs),
            pl.BlockSpec((bb, 1, F), lambda i: (i, 0, 0)),
        ]
        if fold_output:
            out_shape = jax.ShapeDtypeStruct((B, 1, T * F), x.dtype)
            out_specs = pl.BlockSpec((bb, 1, T * F), lambda i: (i, 0, 0))
        else:
            out_shape = jax.ShapeDtypeStruct((B, T, F), x.dtype)
            out_specs = pl.BlockSpec((bb, T, F), lambda i: (i, 0, 0))

        itemsize = jnp.dtype(x.dtype).itemsize
        cost = pl.CostEstimate(
            flops=2 * B * N * F * F,
            transcendentals=2 * B * N * F,            # exp + approx reciprocal
            bytes_accessed=itemsize * (B * N * F + B * T * F)
            + F * F * self.compute_dtype.itemsize + B * F * 4,
        )

        out = pl.pallas_call(
            kernel,
            out_shape=out_shape,
            grid_spec=pltpu.PrefetchScalarGridSpec(
                num_scalar_prefetch=0,
                grid=grid,
                in_specs=in_specs,
                out_specs=out_specs,
            ),
            compiler_params=pltpu.CompilerParams(
                dimension_semantics=("parallel",),
                vmem_limit_bytes=vmem_limit,
            ),
            cost_estimate=cost,
        )(x, self.w1t_mxu, cls_proj)

        if fold_output:
            out = out.reshape(B, T, F)                # row-major relabel, free
        return out


if __name__ == "__main__":
    key = jax.random.PRNGKey(0)
    kx, kp = jax.random.split(key)

    # ViT-style tokens: batch=2, seq = 1 CLS + 16 patch tokens, in_features=32.
    B, N, F = 2, 17, 32
    x = jax.random.normal(kx, (B, N, F), dtype=jnp.float32)

    mod = ProjectReadout(in_features=F, start_index=1, key=kp)
    y = jax.block_until_ready(mod(x))

    assert y.shape == (B, N - 1, F), y.shape
    assert y.dtype == x.dtype

    # Pure-JAX reference matching the PyTorch forward exactly (f32 everywhere).
    tokens = x[:, 1:]
    readout = jnp.broadcast_to(x[:, :1, :], tokens.shape)
    feats = jnp.concatenate([tokens, readout], axis=-1)
    ref = jax.nn.gelu(
        jnp.einsum("btk,fk->btf", feats, mod.w,
                   precision=jax.lax.Precision.HIGHEST) + mod.b,
        approximate=False)

    # Reference using the same bf16 MXU operands / f32 accumulation as the
    # kernel (tight check), plus the looser check against exact f32 math.
    z_tok = jnp.einsum("btf,gf->btg", tokens.astype(jnp.bfloat16),
                       mod.w[:, :F].astype(jnp.bfloat16),
                       preferred_element_type=jnp.float32)
    z_cls = jnp.dot(x[:, 0, :].astype(jnp.float32), mod.w2t_f32,
                    precision=jax.lax.Precision.HIGHEST) + mod.b_f32
    ref_bf16 = jax.nn.gelu(z_tok + z_cls[:, None, :], approximate=False)

    err_bf16 = float(jnp.max(jnp.abs(y - ref_bf16)))
    err_exact = float(jnp.max(jnp.abs(y - ref)))
    assert jnp.allclose(y, ref_bf16, atol=1e-2, rtol=1e-2), (err_bf16, err_exact)
    assert jnp.allclose(y, ref, atol=6e-2, rtol=6e-2), (err_bf16, err_exact)

    print("KERNEL_OK")
</pallas_src>

<mosaic_0001>
module attributes {stable_mosaic.version = 11 : i64} {
  func.func @_project_readout_kernel(%arg0: i32, %arg1: memref<2x17x32xf32, #tpu.memory_space<vmem>>, %arg2: memref<32x32xbf16, #tpu.memory_space<vmem>>, %arg3: memref<2x1x32xf32, #tpu.memory_space<vmem>>, %arg4: memref<2x1x512xf32, #tpu.memory_space<vmem>>) attributes {dimension_semantics = [#tpu.dimension_semantics<parallel>], iteration_bounds = array<i64: 1>, scalar_prefetch = 0 : i64, scratch_operands = 0 : i64, tpu.core_type = #tpu.core_type<tc>, window_params = [{transform_indices = @transform_0, window_bounds = array<i64: 2, 17, 32>}, {pipeline_mode = #tpu.pipeline_mode<synchronous>, transform_indices = @transform_1, window_bounds = array<i64: 32, 32>}, {transform_indices = @transform_2, window_bounds = array<i64: 2, 1, 32>}, {transform_indices = @transform_3, window_bounds = array<i64: 2, 1, 512>}]} {
    %c0 = arith.constant 0 : index
    %c0_0 = arith.constant 0 : index
    %0 = vector.load %arg2[%c0, %c0_0] : memref<32x32xbf16, #tpu.memory_space<vmem>>, vector<32x32xbf16>
    %c0_1 = arith.constant 0 : index
    %c0_2 = arith.constant 0 : index
    %c0_3 = arith.constant 0 : index
    %1 = vector.load %arg1[%c0_1, %c0_2, %c0_3] : memref<2x17x32xf32, #tpu.memory_space<vmem>>, vector<1x17x32xf32>
    %2 = vector.shape_cast %1 : vector<1x17x32xf32> to vector<17x32xf32>
    %3 = arith.truncf %2 : vector<17x32xf32> to vector<17x32xbf16>
    %cst = arith.constant dense<0.000000e+00> : vector<17x32xf32>
    %4 = tpu.matmul %3, %0, %cst {dimension_numbers = #tpu.dot_dimension_numbers<[1], [0], [0], [1], [0, 0, 1, 1], [], []>} : vector<17x32xbf16>, vector<32x32xbf16>, vector<17x32xf32> -> vector<17x32xf32>
    %c0_4 = arith.constant 0 : index
    %c0_5 = arith.constant 0 : index
    %c0_6 = arith.constant 0 : index
    %5 = vector.load %arg3[%c0_4, %c0_5, %c0_6] : memref<2x1x32xf32, #tpu.memory_space<vmem>>, vector<1x1x32xf32>
    %6 = vector.shape_cast %5 : vector<1x1x32xf32> to vector<1x32xf32>
    %7 = vector.broadcast %6 : vector<1x32xf32> to vector<17x32xf32>
    %8 = arith.addf %4, %7 : vector<17x32xf32>
    %cst_7 = arith.constant 5.000000e-01 : f32
    %9 = vector.broadcast %cst_7 : f32 to vector<17x32xf32>
    %10 = arith.mulf %9, %8 : vector<17x32xf32>
    %cst_8 = arith.constant 0.707106769 : f32
    %11 = vector.broadcast %cst_8 : f32 to vector<17x32xf32>
    %12 = arith.mulf %8, %11 : vector<17x32xf32>
    %13 = math.absf %12 : vector<17x32xf32>
    %cst_9 = arith.constant 0.327591091 : f32
    %14 = vector.broadcast %cst_9 : f32 to vector<17x32xf32>
    %15 = arith.mulf %14, %13 : vector<17x32xf32>
    %cst_10 = arith.constant 1.000000e+00 : f32
    %16 = vector.broadcast %cst_10 : f32 to vector<17x32xf32>
    %17 = arith.addf %16, %15 : vector<17x32xf32>
    %18 = tpu.reciprocal %17 {approx = true} : vector<17x32xf32> -> vector<17x32xf32>
    %cst_11 = arith.constant 1.06140542 : f32
    %19 = vector.broadcast %cst_11 : f32 to vector<17x32xf32>
    %20 = arith.mulf %19, %18 : vector<17x32xf32>
    %cst_12 = arith.constant -1.45315206 : f32
    %21 = vector.broadcast %cst_12 : f32 to vector<17x32xf32>
    %22 = arith.addf %20, %21 : vector<17x32xf32>
    %23 = arith.mulf %22, %18 : vector<17x32xf32>
    %cst_13 = arith.constant 1.42141378 : f32
    %24 = vector.broadcast %cst_13 : f32 to vector<17x32xf32>
    %25 = arith.addf %23, %24 : vector<17x32xf32>
    %26 = arith.mulf %25, %18 : vector<17x32xf32>
    %cst_14 = arith.constant -0.284496725 : f32
    %27 = vector.broadcast %cst_14 : f32 to vector<17x32xf32>
    %28 = arith.addf %26, %27 : vector<17x32xf32>
    %29 = arith.mulf %28, %18 : vector<17x32xf32>
    %cst_15 = arith.constant 0.254829586 : f32
    %30 = vector.broadcast %cst_15 : f32 to vector<17x32xf32>
    %31 = arith.addf %29, %30 : vector<17x32xf32>
    %32 = arith.mulf %31, %18 : vector<17x32xf32>
    %33 = arith.mulf %13, %13 : vector<17x32xf32>
    %cst_16 = arith.constant 0.000000e+00 : f32
    %34 = vector.broadcast %cst_16 : f32 to vector<17x32xf32>
    %35 = arith.subf %34, %33 : vector<17x32xf32>
    %36 = math.exp %35 : vector<17x32xf32>
    %37 = arith.mulf %32, %36 : vector<17x32xf32>
    %cst_17 = arith.constant 1.000000e+00 : f32
    %38 = vector.broadcast %cst_17 : f32 to vector<17x32xf32>
    %39 = arith.subf %38, %37 : vector<17x32xf32>
    %cst_18 = arith.constant 0.000000e+00 : f32
    %40 = vector.broadcast %cst_18 : f32 to vector<17x32xf32>
    %41 = arith.cmpf olt, %12, %40 : vector<17x32xf32>
    %cst_19 = arith.constant 0.000000e+00 : f32
    %42 = vector.broadcast %cst_19 : f32 to vector<17x32xf32>
    %43 = arith.subf %42, %39 : vector<17x32xf32>
    %44 = arith.select %41, %43, %39 : vector<17x32xi1>, vector<17x32xf32>
    %cst_20 = arith.constant 1.000000e+00 : f32
    %45 = vector.broadcast %cst_20 : f32 to vector<17x32xf32>
    %46 = arith.addf %45, %44 : vector<17x32xf32>
    %47 = arith.mulf %10, %46 : vector<17x32xf32>
    %48 = vector.extract_strided_slice %47 {offsets = [1, 0], sizes = [16, 32], strides = [1, 1]} : vector<17x32xf32> to vector<16x32xf32>
    %49 = vector.shape_cast %48 : vector<16x32xf32> to vector<1x512xf32>
    %c0_21 = arith.constant 0 : index
    %c0_22 = arith.constant 0 : index
    %c0_23 = arith.constant 0 : index
    %50 = vector.load %arg4[%c0_21, %c0_22, %c0_23] : memref<2x1x512xf32, #tpu.memory_space<vmem>>, vector<1x1x512xf32>
    %51 = vector.shape_cast %50 : vector<1x1x512xf32> to vector<1x512xf32>
    %52 = vector.shape_cast %49 : vector<1x512xf32> to vector<1x1x512xf32>
    tpu.vector_store %arg4[%c0_21, %c0_22, %c0_23], %52 {strides = array<i32>} : memref<2x1x512xf32, #tpu.memory_space<vmem>>, vector<1x1x512xf32>,
    %c1 = arith.constant 1 : index
    %c0_24 = arith.constant 0 : index
    %c0_25 = arith.constant 0 : index
    %53 = vector.load %arg1[%c1, %c0_24, %c0_25] : memref<2x17x32xf32, #tpu.memory_space<vmem>>, vector<1x17x32xf32>
    %54 = vector.shape_cast %53 : vector<1x17x32xf32> to vector<17x32xf32>
    %55 = arith.truncf %54 : vector<17x32xf32> to vector<17x32xbf16>
    %cst_26 = arith.constant dense<0.000000e+00> : vector<17x32xf32>
    %56 = tpu.matmul %55, %0, %cst_26 {dimension_numbers = #tpu.dot_dimension_numbers<[1], [0], [0], [1], [0, 0, 1, 1], [], []>} : vector<17x32xbf16>, vector<32x32xbf16>, vector<17x32xf32> -> vector<17x32xf32>
    %c1_27 = arith.constant 1 : index
    %c0_28 = arith.constant 0 : index
    %c0_29 = arith.constant 0 : index
    %57 = vector.load %arg3[%c1_27, %c0_28, %c0_29] : memref<2x1x32xf32, #tpu.memory_space<vmem>>, vector<1x1x32xf32>
    %58 = vector.shape_cast %57 : vector<1x1x32xf32> to vector<1x32xf32>
    %59 = vector.broadcast %58 : vector<1x32xf32> to vector<17x32xf32>
    %60 = arith.addf %56, %59 : vector<17x32xf32>
    %cst_30 = arith.constant 5.000000e-01 : f32
    %61 = vector.broadcast %cst_30 : f32 to vector<17x32xf32>
    %62 = arith.mulf %61, %60 : vector<17x32xf32>
    %cst_31 = arith.constant 0.707106769 : f32
    %63 = vector.broadcast %cst_31 : f32 to vector<17x32xf32>
    %64 = arith.mulf %60, %63 : vector<17x32xf32>
    %65 = math.absf %64 : vector<17x32xf32>
    %cst_32 = arith.constant 0.327591091 : f32
    %66 = vector.broadcast %cst_32 : f32 to vector<17x32xf32>
    %67 = arith.mulf %66, %65 : vector<17x32xf32>
    %cst_33 = arith.constant 1.000000e+00 : f32
    %68 = vector.broadcast %cst_33 : f32 to vector<17x32xf32>
    %69 = arith.addf %68, %67 : vector<17x32xf32>
    %70 = tpu.reciprocal %69 {approx = true} : vector<17x32xf32> -> vector<17x32xf32>
    %cst_34 = arith.constant 1.06140542 : f32
    %71 = vector.broadcast %cst_34 : f32 to vector<17x32xf32>
    %72 = arith.mulf %71, %70 : vector<17x32xf32>
    %cst_35 = arith.constant -1.45315206 : f32
    %73 = vector.broadcast %cst_35 : f32 to vector<17x32xf32>
    %74 = arith.addf %72, %73 : vector<17x32xf32>
    %75 = arith.mulf %74, %70 : vector<17x32xf32>
    %cst_36 = arith.constant 1.42141378 : f32
    %76 = vector.broadcast %cst_36 : f32 to vector<17x32xf32>
    %77 = arith.addf %75, %76 : vector<17x32xf32>
    %78 = arith.mulf %77, %70 : vector<17x32xf32>
    %cst_37 = arith.constant -0.284496725 : f32
    %79 = vector.broadcast %cst_37 : f32 to vector<17x32xf32>
    %80 = arith.addf %78, %79 : vector<17x32xf32>
    %81 = arith.mulf %80, %70 : vector<17x32xf32>
    %cst_38 = arith.constant 0.254829586 : f32
    %82 = vector.broadcast %cst_38 : f32 to vector<17x32xf32>
    %83 = arith.addf %81, %82 : vector<17x32xf32>
    %84 = arith.mulf %83, %70 : vector<17x32xf32>
    %85 = arith.mulf %65, %65 : vector<17x32xf32>
    %cst_39 = arith.constant 0.000000e+00 : f32
    %86 = vector.broadcast %cst_39 : f32 to vector<17x32xf32>
    %87 = arith.subf %86, %85 : vector<17x32xf32>
    %88 = math.exp %87 : vector<17x32xf32>
    %89 = arith.mulf %84, %88 : vector<17x32xf32>
    %cst_40 = arith.constant 1.000000e+00 : f32
    %90 = vector.broadcast %cst_40 : f32 to vector<17x32xf32>
    %91 = arith.subf %90, %89 : vector<17x32xf32>
    %cst_41 = arith.constant 0.000000e+00 : f32
    %92 = vector.broadcast %cst_41 : f32 to vector<17x32xf32>
    %93 = arith.cmpf olt, %64, %92 : vector<17x32xf32>
    %cst_42 = arith.constant 0.000000e+00 : f32
    %94 = vector.broadcast %cst_42 : f32 to vector<17x32xf32>
    %95 = arith.subf %94, %91 : vector<17x32xf32>
    %96 = arith.select %93, %95, %91 : vector<17x32xi1>, vector<17x32xf32>
    %cst_43 = arith.constant 1.000000e+00 : f32
    %97 = vector.broadcast %cst_43 : f32 to vector<17x32xf32>
    %98 = arith.addf %97, %96 : vector<17x32xf32>
    %99 = arith.mulf %62, %98 : vector<17x32xf32>
    %100 = vector.extract_strided_slice %99 {offsets = [1, 0], sizes = [16, 32], strides = [1, 1]} : vector<17x32xf32> to vector<16x32xf32>
    %101 = vector.shape_cast %100 : vector<16x32xf32> to vector<1x512xf32>
    %c1_44 = arith.constant 1 : index
    %c0_45 = arith.constant 0 : index
    %c0_46 = arith.constant 0 : index
    %102 = vector.load %arg4[%c1_44, %c0_45, %c0_46] : memref<2x1x512xf32, #tpu.memory_space<vmem>>, vector<1x1x512xf32>
    %103 = vector.shape_cast %102 : vector<1x1x512xf32> to vector<1x512xf32>
    %104 = vector.shape_cast %101 : vector<1x512xf32> to vector<1x1x512xf32>
    tpu.vector_store %arg4[%c1_44, %c0_45, %c0_46], %104 {strides = array<i32>} : memref<2x1x512xf32, #tpu.memory_space<vmem>>, vector<1x1x512xf32>,
    return
  }
  func.func @transform_0(%arg0: i32) -> (i32, i32, i32) {
    %c0_i32 = arith.constant 0 : i32
    %c0_i32_0 = arith.constant 0 : i32
    %c0_i32_1 = arith.constant 0 : i32
    return %arg0, %c0_i32, %c0_i32_0 : i32, i32, i32
  }
  func.func @transform_1(%arg0: i32) -> (i32, i32) {
    %c0_i32 = arith.constant 0 : i32
    %c0_i32_0 = arith.constant 0 : i32
    %c0_i32_1 = arith.constant 0 : i32
    return %c0_i32, %c0_i32_0 : i32, i32
  }
  func.func @transform_2(%arg0: i32) -> (i32, i32, i32) {
    %c0_i32 = arith.constant 0 : i32
    %c0_i32_0 = arith.constant 0 : i32
    %c0_i32_1 = arith.constant 0 : i32
    return %arg0, %c0_i32, %c0_i32_0 : i32, i32, i32
  }
  func.func @transform_3(%arg0: i32) -> (i32, i32, i32) {
    %c0_i32 = arith.constant 0 : i32
    %c0_i32_0 = arith.constant 0 : i32
    %c0_i32_1 = arith.constant 0 : i32
    return %arg0, %c0_i32, %c0_i32_0 : i32, i32, i32
  }
}

module attributes {stable_mosaic.version = 11 : i64} {
  func.func @_project_readout_kernel(%arg0: i32, %arg1: memref<2x17x32xf32, #tpu.memory_space<vmem>>, %arg2: memref<32x32xbf16, #tpu.memory_space<vmem>>, %arg3: memref<2x1x32xf32, #tpu.memory_space<vmem>>, %arg4: memref<2x1x512xf32, #tpu.memory_space<vmem>>) attributes {dimension_semantics = [#tpu.dimension_semantics<parallel>], iteration_bounds = array<i64: 1>, scalar_prefetch = 0 : i64, scratch_operands = 0 : i64, tpu.core_type = #tpu.core_type<tc>, window_params = [{transform_indices = @transform_0, window_bounds = array<i64: 2, 17, 32>}, {pipeline_mode = #tpu.pipeline_mode<synchronous>, transform_indices = @transform_1, window_bounds = array<i64: 32, 32>}, {transform_indices = @transform_2, window_bounds = array<i64: 2, 1, 32>}, {transform_indices = @transform_3, window_bounds = array<i64: 2, 1, 512>}]} {
    %c0 = arith.constant 0 : index
    %c0_0 = arith.constant 0 : index
    %0 = vector.load %arg2[%c0, %c0_0] : memref<32x32xbf16, #tpu.memory_space<vmem>>, vector<32x32xbf16>
    %c0_1 = arith.constant 0 : index
    %c0_2 = arith.constant 0 : index
    %c0_3 = arith.constant 0 : index
    %1 = vector.load %arg1[%c0_1, %c0_2, %c0_3] : memref<2x17x32xf32, #tpu.memory_space<vmem>>, vector<1x17x32xf32>
    %2 = vector.shape_cast %1 : vector<1x17x32xf32> to vector<17x32xf32>
    %3 = arith.truncf %2 : vector<17x32xf32> to vector<17x32xbf16>
    %cst = arith.constant dense<0.000000e+00> : vector<17x32xf32>
    %4 = tpu.matmul %3, %0, %cst {dimension_numbers = #tpu.dot_dimension_numbers<[1], [0], [0], [1], [0, 0, 1, 1], [], []>} : vector<17x32xbf16>, vector<32x32xbf16>, vector<17x32xf32> -> vector<17x32xf32>
    %c0_4 = arith.constant 0 : index
    %c0_5 = arith.constant 0 : index
    %c0_6 = arith.constant 0 : index
    %5 = vector.load %arg3[%c0_4, %c0_5, %c0_6] : memref<2x1x32xf32, #tpu.memory_space<vmem>>, vector<1x1x32xf32>
    %6 = vector.shape_cast %5 : vector<1x1x32xf32> to vector<1x32xf32>
    %7 = vector.broadcast %6 : vector<1x32xf32> to vector<17x32xf32>
    %8 = arith.addf %4, %7 : vector<17x32xf32>
    %cst_7 = arith.constant 5.000000e-01 : f32
    %9 = vector.broadcast %cst_7 : f32 to vector<17x32xf32>
    %10 = arith.mulf %9, %8 : vector<17x32xf32>
    %cst_8 = arith.constant 0.707106769 : f32
    %11 = vector.broadcast %cst_8 : f32 to vector<17x32xf32>
    %12 = arith.mulf %8, %11 : vector<17x32xf32>
    %13 = math.absf %12 : vector<17x32xf32>
    %cst_9 = arith.constant 0.327591091 : f32
    %14 = vector.broadcast %cst_9 : f32 to vector<17x32xf32>
    %15 = arith.mulf %14, %13 : vector<17x32xf32>
    %cst_10 = arith.constant 1.000000e+00 : f32
    %16 = vector.broadcast %cst_10 : f32 to vector<17x32xf32>
    %17 = arith.addf %16, %15 : vector<17x32xf32>
    %18 = tpu.reciprocal %17 {approx = true} : vector<17x32xf32> -> vector<17x32xf32>
    %cst_11 = arith.constant 1.06140542 : f32
    %19 = vector.broadcast %cst_11 : f32 to vector<17x32xf32>
    %20 = arith.mulf %19, %18 : vector<17x32xf32>
    %cst_12 = arith.constant -1.45315206 : f32
    %21 = vector.broadcast %cst_12 : f32 to vector<17x32xf32>
    %22 = arith.addf %20, %21 : vector<17x32xf32>
    %23 = arith.mulf %22, %18 : vector<17x32xf32>
    %cst_13 = arith.constant 1.42141378 : f32
    %24 = vector.broadcast %cst_13 : f32 to vector<17x32xf32>
    %25 = arith.addf %23, %24 : vector<17x32xf32>
    %26 = arith.mulf %25, %18 : vector<17x32xf32>
    %cst_14 = arith.constant -0.284496725 : f32
    %27 = vector.broadcast %cst_14 : f32 to vector<17x32xf32>
    %28 = arith.addf %26, %27 : vector<17x32xf32>
    %29 = arith.mulf %28, %18 : vector<17x32xf32>
    %cst_15 = arith.constant 0.254829586 : f32
    %30 = vector.broadcast %cst_15 : f32 to vector<17x32xf32>
    %31 = arith.addf %29, %30 : vector<17x32xf32>
    %32 = arith.mulf %31, %18 : vector<17x32xf32>
    %33 = arith.mulf %13, %13 : vector<17x32xf32>
    %cst_16 = arith.constant 0.000000e+00 : f32
    %34 = vector.broadcast %cst_16 : f32 to vector<17x32xf32>
    %35 = arith.subf %34, %33 : vector<17x32xf32>
    %36 = math.exp %35 : vector<17x32xf32>
    %37 = arith.mulf %32, %36 : vector<17x32xf32>
    %cst_17 = arith.constant 1.000000e+00 : f32
    %38 = vector.broadcast %cst_17 : f32 to vector<17x32xf32>
    %39 = arith.subf %38, %37 : vector<17x32xf32>
    %cst_18 = arith.constant 0.000000e+00 : f32
    %40 = vector.broadcast %cst_18 : f32 to vector<17x32xf32>
    %41 = arith.cmpf olt, %12, %40 : vector<17x32xf32>
    %cst_19 = arith.constant 0.000000e+00 : f32
    %42 = vector.broadcast %cst_19 : f32 to vector<17x32xf32>
    %43 = arith.subf %42, %39 : vector<17x32xf32>
    %44 = arith.select %41, %43, %39 : vector<17x32xi1>, vector<17x32xf32>
    %cst_20 = arith.constant 1.000000e+00 : f32
    %45 = vector.broadcast %cst_20 : f32 to vector<17x32xf32>
    %46 = arith.addf %45, %44 : vector<17x32xf32>
    %47 = arith.mulf %10, %46 : vector<17x32xf32>
    %48 = vector.extract_strided_slice %47 {offsets = [1, 0], sizes = [16, 32], strides = [1, 1]} : vector<17x32xf32> to vector<16x32xf32>
    %49 = vector.shape_cast %48 : vector<16x32xf32> to vector<1x512xf32>
    %c0_21 = arith.constant 0 : index
    %c0_22 = arith.constant 0 : index
    %c0_23 = arith.constant 0 : index
    %50 = vector.load %arg4[%c0_21, %c0_22, %c0_23] : memref<2x1x512xf32, #tpu.memory_space<vmem>>, vector<1x1x512xf32>
    %51 = vector.shape_cast %50 : vector<1x1x512xf32> to vector<1x512xf32>
    %52 = vector.shape_cast %49 : vector<1x512xf32> to vector<1x1x512xf32>
    tpu.vector_store %arg4[%c0_21, %c0_22, %c0_23], %52 {strides = array<i32>} : memref<2x1x512xf32, #tpu.memory_space<vmem>>, vector<1x1x512xf32>,
    %c1 = arith.constant 1 : index
    %c0_24 = arith.constant 0 : index
    %c0_25 = arith.constant 0 : index
    %53 = vector.load %arg1[%c1, %c0_24, %c0_25] : memref<2x17x32xf32, #tpu.memory_space<vmem>>, vector<1x17x32xf32>
    %54 = vector.shape_cast %53 : vector<1x17x32xf32> to vector<17x32xf32>
    %55 = arith.truncf %54 : vector<17x32xf32> to vector<17x32xbf16>
    %cst_26 = arith.constant dense<0.000000e+00> : vector<17x32xf32>
    %56 = tpu.matmul %55, %0, %cst_26 {dimension_numbers = #tpu.dot_dimension_numbers<[1], [0], [0], [1], [0, 0, 1, 1], [], []>} : vector<17x32xbf16>, vector<32x32xbf16>, vector<17x32xf32> -> vector<17x32xf32>
    %c1_27 = arith.constant 1 : index
    %c0_28 = arith.constant 0 : index
    %c0_29 = arith.constant 0 : index
    %57 = vector.load %arg3[%c1_27, %c0_28, %c0_29] : memref<2x1x32xf32, #tpu.memory_space<vmem>>, vector<1x1x32xf32>
    %58 = vector.shape_cast %57 : vector<1x1x32xf32> to vector<1x32xf32>
    %59 = vector.broadcast %58 : vector<1x32xf32> to vector<17x32xf32>
    %60 = arith.addf %56, %59 : vector<17x32xf32>
    %cst_30 = arith.constant 5.000000e-01 : f32
    %61 = vector.broadcast %cst_30 : f32 to vector<17x32xf32>
    %62 = arith.mulf %61, %60 : vector<17x32xf32>
    %cst_31 = arith.constant 0.707106769 : f32
    %63 = vector.broadcast %cst_31 : f32 to vector<17x32xf32>
    %64 = arith.mulf %60, %63 : vector<17x32xf32>
    %65 = math.absf %64 : vector<17x32xf32>
    %cst_32 = arith.constant 0.327591091 : f32
    %66 = vector.broadcast %cst_32 : f32 to vector<17x32xf32>
    %67 = arith.mulf %66, %65 : vector<17x32xf32>
    %cst_33 = arith.constant 1.000000e+00 : f32
    %68 = vector.broadcast %cst_33 : f32 to vector<17x32xf32>
    %69 = arith.addf %68, %67 : vector<17x32xf32>
    %70 = tpu.reciprocal %69 {approx = true} : vector<17x32xf32> -> vector<17x32xf32>
    %cst_34 = arith.constant 1.06140542 : f32
    %71 = vector.broadcast %cst_34 : f32 to vector<17x32xf32>
    %72 = arith.mulf %71, %70 : vector<17x32xf32>
    %cst_35 = arith.constant -1.45315206 : f32
    %73 = vector.broadcast %cst_35 : f32 to vector<17x32xf32>
    %74 = arith.addf %72, %73 : vector<17x32xf32>
    %75 = arith.mulf %74, %70 : vector<17x32xf32>
    %cst_36 = arith.constant 1.42141378 : f32
    %76 = vector.broadcast %cst_36 : f32 to vector<17x32xf32>
    %77 = arith.addf %75, %76 : vector<17x32xf32>
    %78 = arith.mulf %77, %70 : vector<17x32xf32>
    %cst_37 = arith.constant -0.284496725 : f32
    %79 = vector.broadcast %cst_37 : f32 to vector<17x32xf32>
    %80 = arith.addf %78, %79 : vector<17x32xf32>
    %81 = arith.mulf %80, %70 : vector<17x32xf32>
    %cst_38 = arith.constant 0.254829586 : f32
    %82 = vector.broadcast %cst_38 : f32 to vector<17x32xf32>
    %83 = arith.addf %81, %82 : vector<17x32xf32>
    %84 = arith.mulf %83, %70 : vector<17x32xf32>
    %85 = arith.mulf %65, %65 : vector<17x32xf32>
    %cst_39 = arith.constant 0.000000e+00 : f32
    %86 = vector.broadcast %cst_39 : f32 to vector<17x32xf32>
    %87 = arith.subf %86, %85 : vector<17x32xf32>
    %88 = math.exp %87 : vector<17x32xf32>
    %89 = arith.mulf %84, %88 : vector<17x32xf32>
    %cst_40 = arith.constant 1.000000e+00 : f32
    %90 = vector.broadcast %cst_40 : f32 to vector<17x32xf32>
    %91 = arith.subf %90, %89 : vector<17x32xf32>
    %cst_41 = arith.constant 0.000000e+00 : f32
    %92 = vector.broadcast %cst_41 : f32 to vector<17x32xf32>
    %93 = arith.cmpf olt, %64, %92 : vector<17x32xf32>
    %cst_42 = arith.constant 0.000000e+00 : f32
    %94 = vector.broadcast %cst_42 : f32 to vector<17x32xf32>
    %95 = arith.subf %94, %91 : vector<17x32xf32>
    %96 = arith.select %93, %95, %91 : vector<17x32xi1>, vector<17x32xf32>
    %cst_43 = arith.constant 1.000000e+00 : f32
    %97 = vector.broadcast %cst_43 : f32 to vector<17x32xf32>
    %98 = arith.addf %97, %96 : vector<17x32xf32>
    %99 = arith.mulf %62, %98 : vector<17x32xf32>
    %100 = vector.extract_strided_slice %99 {offsets = [1, 0], sizes = [16, 32], strides = [1, 1]} : vector<17x32xf32> to vector<16x32xf32>
    %101 = vector.shape_cast %100 : vector<16x32xf32> to vector<1x512xf32>
    %c1_44 = arith.constant 1 : index
    %c0_45 = arith.constant 0 : index
    %c0_46 = arith.constant 0 : index
    %102 = vector.load %arg4[%c1_44, %c0_45, %c0_46] : memref<2x1x512xf32, #tpu.memory_space<vmem>>, vector<1x1x512xf32>
    %103 = vector.shape_cast %102 : vector<1x1x512xf32> to vector<1x512xf32>
    %104 = vector.shape_cast %101 : vector<1x512xf32> to vector<1x1x512xf32>
    tpu.vector_store %arg4[%c1_44, %c0_45, %c0_46], %104 {strides = array<i32>} : memref<2x1x512xf32, #tpu.memory_space<vmem>>, vector<1x1x512xf32>,
    return
  }
  func.func @transform_0(%arg0: i32) -> (i32, i32, i32) {
    %c0_i32 = arith.constant 0 : i32
    %c0_i32_0 = arith.constant 0 : i32
    %c0_i32_1 = arith.constant 0 : i32
    return %arg0, %c0_i32, %c0_i32_0 : i32, i32, i32
  }
  func.func @transform_1(%arg0: i32) -> (i32, i32) {
    %c0_i32 = arith.constant 0 : i32
    %c0_i32_0 = arith.constant 0 : i32
    %c0_i32_1 = arith.constant 0 : i32
    return %c0_i32, %c0_i32_0 : i32, i32
  }
  func.func @transform_2(%arg0: i32) -> (i32, i32, i32) {
    %c0_i32 = arith.constant 0 : i32
    %c0_i32_0 = arith.constant 0 : i32
    %c0_i32_1 = arith.constant 0 : i32
    return %arg0, %c0_i32, %c0_i32_0 : i32, i32, i32
  }
  func.func @transform_3(%arg0: i32) -> (i32, i32, i32) {
    %c0_i32 = arith.constant 0 : i32
    %c0_i32_0 = arith.constant 0 : i32
    %c0_i32_1 = arith.constant 0 : i32
    return %arg0, %c0_i32, %c0_i32_0 : i32, i32, i32
  }
}

module attributes {stable_mosaic.version = 11 : i64} {
  func.func @_project_readout_kernel(%arg0: i32, %arg1: memref<2x17x32xf32, #tpu.memory_space<vmem>>, %arg2: memref<32x32xbf16, #tpu.memory_space<vmem>>, %arg3: memref<2x1x32xf32, #tpu.memory_space<vmem>>, %arg4: memref<2x16x32xf32, #tpu.memory_space<vmem>>) attributes {dimension_semantics = [#tpu.dimension_semantics<parallel>], iteration_bounds = array<i64: 1>, scalar_prefetch = 0 : i64, scratch_operands = 0 : i64, tpu.core_type = #tpu.core_type<tc>, window_params = [{transform_indices = @transform_0, window_bounds = array<i64: 2, 17, 32>}, {pipeline_mode = #tpu.pipeline_mode<synchronous>, transform_indices = @transform_1, window_bounds = array<i64: 32, 32>}, {transform_indices = @transform_2, window_bounds = array<i64: 2, 1, 32>}, {transform_indices = @transform_3, window_bounds = array<i64: 2, 16, 32>}]} {
    %c0 = arith.constant 0 : index
    %c0_0 = arith.constant 0 : index
    %0 = vector.load %arg2[%c0, %c0_0] : memref<32x32xbf16, #tpu.memory_space<vmem>>, vector<32x32xbf16>
    %c0_1 = arith.constant 0 : index
    %c0_2 = arith.constant 0 : index
    %c0_3 = arith.constant 0 : index
    %1 = vector.load %arg1[%c0_1, %c0_2, %c0_3] : memref<2x17x32xf32, #tpu.memory_space<vmem>>, vector<1x17x32xf32>
    %2 = vector.shape_cast %1 : vector<1x17x32xf32> to vector<17x32xf32>
    %3 = arith.truncf %2 : vector<17x32xf32> to vector<17x32xbf16>
    %cst = arith.constant dense<0.000000e+00> : vector<17x32xf32>
    %4 = tpu.matmul %3, %0, %cst {dimension_numbers = #tpu.dot_dimension_numbers<[1], [0], [0], [1], [0, 0, 1, 1], [], []>} : vector<17x32xbf16>, vector<32x32xbf16>, vector<17x32xf32> -> vector<17x32xf32>
    %c0_4 = arith.constant 0 : index
    %c0_5 = arith.constant 0 : index
    %c0_6 = arith.constant 0 : index
    %5 = vector.load %arg3[%c0_4, %c0_5, %c0_6] : memref<2x1x32xf32, #tpu.memory_space<vmem>>, vector<1x1x32xf32>
    %6 = vector.shape_cast %5 : vector<1x1x32xf32> to vector<1x32xf32>
    %7 = vector.broadcast %6 : vector<1x32xf32> to vector<17x32xf32>
    %8 = arith.addf %4, %7 : vector<17x32xf32>
    %cst_7 = arith.constant 5.000000e-01 : f32
    %9 = vector.broadcast %cst_7 : f32 to vector<17x32xf32>
    %10 = arith.mulf %9, %8 : vector<17x32xf32>
    %cst_8 = arith.constant 0.707106769 : f32
    %11 = vector.broadcast %cst_8 : f32 to vector<17x32xf32>
    %12 = arith.mulf %8, %11 : vector<17x32xf32>
    %13 = math.absf %12 : vector<17x32xf32>
    %cst_9 = arith.constant 0.327591091 : f32
    %14 = vector.broadcast %cst_9 : f32 to vector<17x32xf32>
    %15 = arith.mulf %14, %13 : vector<17x32xf32>
    %cst_10 = arith.constant 1.000000e+00 : f32
    %16 = vector.broadcast %cst_10 : f32 to vector<17x32xf32>
    %17 = arith.addf %16, %15 : vector<17x32xf32>
    %18 = tpu.reciprocal %17 {approx = true} : vector<17x32xf32> -> vector<17x32xf32>
    %cst_11 = arith.constant 1.06140542 : f32
    %19 = vector.broadcast %cst_11 : f32 to vector<17x32xf32>
    %20 = arith.mulf %19, %18 : vector<17x32xf32>
    %cst_12 = arith.constant -1.45315206 : f32
    %21 = vector.broadcast %cst_12 : f32 to vector<17x32xf32>
    %22 = arith.addf %20, %21 : vector<17x32xf32>
    %23 = arith.mulf %22, %18 : vector<17x32xf32>
    %cst_13 = arith.constant 1.42141378 : f32
    %24 = vector.broadcast %cst_13 : f32 to vector<17x32xf32>
    %25 = arith.addf %23, %24 : vector<17x32xf32>
    %26 = arith.mulf %25, %18 : vector<17x32xf32>
    %cst_14 = arith.constant -0.284496725 : f32
    %27 = vector.broadcast %cst_14 : f32 to vector<17x32xf32>
    %28 = arith.addf %26, %27 : vector<17x32xf32>
    %29 = arith.mulf %28, %18 : vector<17x32xf32>
    %cst_15 = arith.constant 0.254829586 : f32
    %30 = vector.broadcast %cst_15 : f32 to vector<17x32xf32>
    %31 = arith.addf %29, %30 : vector<17x32xf32>
    %32 = arith.mulf %31, %18 : vector<17x32xf32>
    %33 = arith.mulf %13, %13 : vector<17x32xf32>
    %cst_16 = arith.constant 0.000000e+00 : f32
    %34 = vector.broadcast %cst_16 : f32 to vector<17x32xf32>
    %35 = arith.subf %34, %33 : vector<17x32xf32>
    %36 = math.exp %35 : vector<17x32xf32>
    %37 = arith.mulf %32, %36 : vector<17x32xf32>
    %cst_17 = arith.constant 1.000000e+00 : f32
    %38 = vector.broadcast %cst_17 : f32 to vector<17x32xf32>
    %39 = arith.subf %38, %37 : vector<17x32xf32>
    %cst_18 = arith.constant 0.000000e+00 : f32
    %40 = vector.broadcast %cst_18 : f32 to vector<17x32xf32>
    %41 = arith.cmpf olt, %12, %40 : vector<17x32xf32>
    %cst_19 = arith.constant 0.000000e+00 : f32
    %42 = vector.broadcast %cst_19 : f32 to vector<17x32xf32>
    %43 = arith.subf %42, %39 : vector<17x32xf32>
    %44 = arith.select %41, %43, %39 : vector<17x32xi1>, vector<17x32xf32>
    %cst_20 = arith.constant 1.000000e+00 : f32
    %45 = vector.broadcast %cst_20 : f32 to vector<17x32xf32>
    %46 = arith.addf %45, %44 : vector<17x32xf32>
    %47 = arith.mulf %10, %46 : vector<17x32xf32>
    %48 = vector.extract_strided_slice %47 {offsets = [1, 0], sizes = [16, 32], strides = [1, 1]} : vector<17x32xf32> to vector<16x32xf32>
    %c0_21 = arith.constant 0 : index
    %c0_22 = arith.constant 0 : index
    %c0_23 = arith.constant 0 : index
    %49 = vector.load %arg4[%c0_21, %c0_22, %c0_23] : memref<2x16x32xf32, #tpu.memory_space<vmem>>, vector<1x16x32xf32>
    %50 = vector.shape_cast %49 : vector<1x16x32xf32> to vector<16x32xf32>
    %51 = vector.shape_cast %48 : vector<16x32xf32> to vector<1x16x32xf32>
    tpu.vector_store %arg4[%c0_21, %c0_22, %c0_23], %51 {strides = array<i32>} : memref<2x16x32xf32, #tpu.memory_space<vmem>>, vector<1x16x32xf32>,
    %c1 = arith.constant 1 : index
    %c0_24 = arith.constant 0 : index
    %c0_25 = arith.constant 0 : index
    %52 = vector.load %arg1[%c1, %c0_24, %c0_25] : memref<2x17x32xf32, #tpu.memory_space<vmem>>, vector<1x17x32xf32>
    %53 = vector.shape_cast %52 : vector<1x17x32xf32> to vector<17x32xf32>
    %54 = arith.truncf %53 : vector<17x32xf32> to vector<17x32xbf16>
    %cst_26 = arith.constant dense<0.000000e+00> : vector<17x32xf32>
    %55 = tpu.matmul %54, %0, %cst_26 {dimension_numbers = #tpu.dot_dimension_numbers<[1], [0], [0], [1], [0, 0, 1, 1], [], []>} : vector<17x32xbf16>, vector<32x32xbf16>, vector<17x32xf32> -> vector<17x32xf32>
    %c1_27 = arith.constant 1 : index
    %c0_28 = arith.constant 0 : index
    %c0_29 = arith.constant 0 : index
    %56 = vector.load %arg3[%c1_27, %c0_28, %c0_29] : memref<2x1x32xf32, #tpu.memory_space<vmem>>, vector<1x1x32xf32>
    %57 = vector.shape_cast %56 : vector<1x1x32xf32> to vector<1x32xf32>
    %58 = vector.broadcast %57 : vector<1x32xf32> to vector<17x32xf32>
    %59 = arith.addf %55, %58 : vector<17x32xf32>
    %cst_30 = arith.constant 5.000000e-01 : f32
    %60 = vector.broadcast %cst_30 : f32 to vector<17x32xf32>
    %61 = arith.mulf %60, %59 : vector<17x32xf32>
    %cst_31 = arith.constant 0.707106769 : f32
    %62 = vector.broadcast %cst_31 : f32 to vector<17x32xf32>
    %63 = arith.mulf %59, %62 : vector<17x32xf32>
    %64 = math.absf %63 : vector<17x32xf32>
    %cst_32 = arith.constant 0.327591091 : f32
    %65 = vector.broadcast %cst_32 : f32 to vector<17x32xf32>
    %66 = arith.mulf %65, %64 : vector<17x32xf32>
    %cst_33 = arith.constant 1.000000e+00 : f32
    %67 = vector.broadcast %cst_33 : f32 to vector<17x32xf32>
    %68 = arith.addf %67, %66 : vector<17x32xf32>
    %69 = tpu.reciprocal %68 {approx = true} : vector<17x32xf32> -> vector<17x32xf32>
    %cst_34 = arith.constant 1.06140542 : f32
    %70 = vector.broadcast %cst_34 : f32 to vector<17x32xf32>
    %71 = arith.mulf %70, %69 : vector<17x32xf32>
    %cst_35 = arith.constant -1.45315206 : f32
    %72 = vector.broadcast %cst_35 : f32 to vector<17x32xf32>
    %73 = arith.addf %71, %72 : vector<17x32xf32>
    %74 = arith.mulf %73, %69 : vector<17x32xf32>
    %cst_36 = arith.constant 1.42141378 : f32
    %75 = vector.broadcast %cst_36 : f32 to vector<17x32xf32>
    %76 = arith.addf %74, %75 : vector<17x32xf32>
    %77 = arith.mulf %76, %69 : vector<17x32xf32>
    %cst_37 = arith.constant -0.284496725 : f32
    %78 = vector.broadcast %cst_37 : f32 to vector<17x32xf32>
    %79 = arith.addf %77, %78 : vector<17x32xf32>
    %80 = arith.mulf %79, %69 : vector<17x32xf32>
    %cst_38 = arith.constant 0.254829586 : f32
    %81 = vector.broadcast %cst_38 : f32 to vector<17x32xf32>
    %82 = arith.addf %80, %81 : vector<17x32xf32>
    %83 = arith.mulf %82, %69 : vector<17x32xf32>
    %84 = arith.mulf %64, %64 : vector<17x32xf32>
    %cst_39 = arith.constant 0.000000e+00 : f32
    %85 = vector.broadcast %cst_39 : f32 to vector<17x32xf32>
    %86 = arith.subf %85, %84 : vector<17x32xf32>
    %87 = math.exp %86 : vector<17x32xf32>
    %88 = arith.mulf %83, %87 : vector<17x32xf32>
    %cst_40 = arith.constant 1.000000e+00 : f32
    %89 = vector.broadcast %cst_40 : f32 to vector<17x32xf32>
    %90 = arith.subf %89, %88 : vector<17x32xf32>
    %cst_41 = arith.constant 0.000000e+00 : f32
    %91 = vector.broadcast %cst_41 : f32 to vector<17x32xf32>
    %92 = arith.cmpf olt, %63, %91 : vector<17x32xf32>
    %cst_42 = arith.constant 0.000000e+00 : f32
    %93 = vector.broadcast %cst_42 : f32 to vector<17x32xf32>
    %94 = arith.subf %93, %90 : vector<17x32xf32>
    %95 = arith.select %92, %94, %90 : vector<17x32xi1>, vector<17x32xf32>
    %cst_43 = arith.constant 1.000000e+00 : f32
    %96 = vector.broadcast %cst_43 : f32 to vector<17x32xf32>
    %97 = arith.addf %96, %95 : vector<17x32xf32>
    %98 = arith.mulf %61, %97 : vector<17x32xf32>
    %99 = vector.extract_strided_slice %98 {offsets = [1, 0], sizes = [16, 32], strides = [1, 1]} : vector<17x32xf32> to vector<16x32xf32>
    %c1_44 = arith.constant 1 : index
    %c0_45 = arith.constant 0 : index
    %c0_46 = arith.constant 0 : index
    %100 = vector.load %arg4[%c1_44, %c0_45, %c0_46] : memref<2x16x32xf32, #tpu.memory_space<vmem>>, vector<1x16x32xf32>
    %101 = vector.shape_cast %100 : vector<1x16x32xf32> to vector<16x32xf32>
    %102 = vector.shape_cast %99 : vector<16x32xf32> to vector<1x16x32xf32>
    tpu.vector_store %arg4[%c1_44, %c0_45, %c0_46], %102 {strides = array<i32>} : memref<2x16x32xf32, #tpu.memory_space<vmem>>, vector<1x16x32xf32>,
    return
  }
  func.func @transform_0(%arg0: i32) -> (i32, i32, i32) {
    %c0_i32 = arith.constant 0 : i32
    %c0_i32_0 = arith.constant 0 : i32
    %c0_i32_1 = arith.constant 0 : i32
    return %arg0, %c0_i32, %c0_i32_0 : i32, i32, i32
  }
  func.func @transform_1(%arg0: i32) -> (i32, i32) {
    %c0_i32 = arith.constant 0 : i32
    %c0_i32_0 = arith.constant 0 : i32
    %c0_i32_1 = arith.constant 0 : i32
    return %c0_i32, %c0_i32_0 : i32, i32
  }
  func.func @transform_2(%arg0: i32) -> (i32, i32, i32) {
    %c0_i32 = arith.constant 0 : i32
    %c0_i32_0 = arith.constant 0 : i32
    %c0_i32_1 = arith.constant 0 : i32
    return %arg0, %c0_i32, %c0_i32_0 : i32, i32, i32
  }
  func.func @transform_3(%arg0: i32) -> (i32, i32, i32) {
    %c0_i32 = arith.constant 0 : i32
    %c0_i32_0 = arith.constant 0 : i32
    %c0_i32_1 = arith.constant 0 : i32
    return %arg0, %c0_i32, %c0_i32_0 : i32, i32, i32
  }
}

module attributes {stable_mosaic.version = 11 : i64} {
  func.func @_project_readout_kernel(%arg0: i32, %arg1: memref<2x17x32xf32, #tpu.memory_space<vmem>>, %arg2: memref<32x32xbf16, #tpu.memory_space<vmem>>, %arg3: memref<2x1x32xf32, #tpu.memory_space<vmem>>, %arg4: memref<2x16x32xf32, #tpu.memory_space<vmem>>) attributes {dimension_semantics = [#tpu.dimension_semantics<parallel>], iteration_bounds = array<i64: 1>, scalar_prefetch = 0 : i64, scratch_operands = 0 : i64, tpu.core_type = #tpu.core_type<tc>, window_params = [{transform_indices = @transform_0, window_bounds = array<i64: 2, 17, 32>}, {pipeline_mode = #tpu.pipeline_mode<synchronous>, transform_indices = @transform_1, window_bounds = array<i64: 32, 32>}, {transform_indices = @transform_2, window_bounds = array<i64: 2, 1, 32>}, {transform_indices = @transform_3, window_bounds = array<i64: 2, 16, 32>}]} {
    %c0 = arith.constant 0 : index
    %c0_0 = arith.constant 0 : index
    %0 = vector.load %arg2[%c0, %c0_0] : memref<32x32xbf16, #tpu.memory_space<vmem>>, vector<32x32xbf16>
    %c0_1 = arith.constant 0 : index
    %c0_2 = arith.constant 0 : index
    %c0_3 = arith.constant 0 : index
    %1 = vector.load %arg1[%c0_1, %c0_2, %c0_3] : memref<2x17x32xf32, #tpu.memory_space<vmem>>, vector<1x17x32xf32>
    %2 = vector.shape_cast %1 : vector<1x17x32xf32> to vector<17x32xf32>
    %3 = arith.truncf %2 : vector<17x32xf32> to vector<17x32xbf16>
    %cst = arith.constant dense<0.000000e+00> : vector<17x32xf32>
    %4 = tpu.matmul %3, %0, %cst {dimension_numbers = #tpu.dot_dimension_numbers<[1], [0], [0], [1], [0, 0, 1, 1], [], []>} : vector<17x32xbf16>, vector<32x32xbf16>, vector<17x32xf32> -> vector<17x32xf32>
    %c0_4 = arith.constant 0 : index
    %c0_5 = arith.constant 0 : index
    %c0_6 = arith.constant 0 : index
    %5 = vector.load %arg3[%c0_4, %c0_5, %c0_6] : memref<2x1x32xf32, #tpu.memory_space<vmem>>, vector<1x1x32xf32>
    %6 = vector.shape_cast %5 : vector<1x1x32xf32> to vector<1x32xf32>
    %7 = vector.broadcast %6 : vector<1x32xf32> to vector<17x32xf32>
    %8 = arith.addf %4, %7 : vector<17x32xf32>
    %cst_7 = arith.constant 5.000000e-01 : f32
    %9 = vector.broadcast %cst_7 : f32 to vector<17x32xf32>
    %10 = arith.mulf %9, %8 : vector<17x32xf32>
    %cst_8 = arith.constant 0.707106769 : f32
    %11 = vector.broadcast %cst_8 : f32 to vector<17x32xf32>
    %12 = arith.mulf %8, %11 : vector<17x32xf32>
    %13 = math.absf %12 : vector<17x32xf32>
    %cst_9 = arith.constant 0.327591091 : f32
    %14 = vector.broadcast %cst_9 : f32 to vector<17x32xf32>
    %15 = arith.mulf %14, %13 : vector<17x32xf32>
    %cst_10 = arith.constant 1.000000e+00 : f32
    %16 = vector.broadcast %cst_10 : f32 to vector<17x32xf32>
    %17 = arith.addf %16, %15 : vector<17x32xf32>
    %18 = tpu.reciprocal %17 {approx = true} : vector<17x32xf32> -> vector<17x32xf32>
    %cst_11 = arith.constant 1.06140542 : f32
    %19 = vector.broadcast %cst_11 : f32 to vector<17x32xf32>
    %20 = arith.mulf %19, %18 : vector<17x32xf32>
    %cst_12 = arith.constant -1.45315206 : f32
    %21 = vector.broadcast %cst_12 : f32 to vector<17x32xf32>
    %22 = arith.addf %20, %21 : vector<17x32xf32>
    %23 = arith.mulf %22, %18 : vector<17x32xf32>
    %cst_13 = arith.constant 1.42141378 : f32
    %24 = vector.broadcast %cst_13 : f32 to vector<17x32xf32>
    %25 = arith.addf %23, %24 : vector<17x32xf32>
    %26 = arith.mulf %25, %18 : vector<17x32xf32>
    %cst_14 = arith.constant -0.284496725 : f32
    %27 = vector.broadcast %cst_14 : f32 to vector<17x32xf32>
    %28 = arith.addf %26, %27 : vector<17x32xf32>
    %29 = arith.mulf %28, %18 : vector<17x32xf32>
    %cst_15 = arith.constant 0.254829586 : f32
    %30 = vector.broadcast %cst_15 : f32 to vector<17x32xf32>
    %31 = arith.addf %29, %30 : vector<17x32xf32>
    %32 = arith.mulf %31, %18 : vector<17x32xf32>
    %33 = arith.mulf %13, %13 : vector<17x32xf32>
    %cst_16 = arith.constant 0.000000e+00 : f32
    %34 = vector.broadcast %cst_16 : f32 to vector<17x32xf32>
    %35 = arith.subf %34, %33 : vector<17x32xf32>
    %36 = math.exp %35 : vector<17x32xf32>
    %37 = arith.mulf %32, %36 : vector<17x32xf32>
    %cst_17 = arith.constant 1.000000e+00 : f32
    %38 = vector.broadcast %cst_17 : f32 to vector<17x32xf32>
    %39 = arith.subf %38, %37 : vector<17x32xf32>
    %cst_18 = arith.constant 0.000000e+00 : f32
    %40 = vector.broadcast %cst_18 : f32 to vector<17x32xf32>
    %41 = arith.cmpf olt, %12, %40 : vector<17x32xf32>
    %cst_19 = arith.constant 0.000000e+00 : f32
    %42 = vector.broadcast %cst_19 : f32 to vector<17x32xf32>
    %43 = arith.subf %42, %39 : vector<17x32xf32>
    %44 = arith.select %41, %43, %39 : vector<17x32xi1>, vector<17x32xf32>
    %cst_20 = arith.constant 1.000000e+00 : f32
    %45 = vector.broadcast %cst_20 : f32 to vector<17x32xf32>
    %46 = arith.addf %45, %44 : vector<17x32xf32>
    %47 = arith.mulf %10, %46 : vector<17x32xf32>
    %48 = vector.extract_strided_slice %47 {offsets = [1, 0], sizes = [16, 32], strides = [1, 1]} : vector<17x32xf32> to vector<16x32xf32>
    %c0_21 = arith.constant 0 : index
    %c0_22 = arith.constant 0 : index
    %c0_23 = arith.constant 0 : index
    %49 = vector.load %arg4[%c0_21, %c0_22, %c0_23] : memref<2x16x32xf32, #tpu.memory_space<vmem>>, vector<1x16x32xf32>
    %50 = vector.shape_cast %49 : vector<1x16x32xf32> to vector<16x32xf32>
    %51 = vector.shape_cast %48 : vector<16x32xf32> to vector<1x16x32xf32>
    tpu.vector_store %arg4[%c0_21, %c0_22, %c0_23], %51 {strides = array<i32>} : memref<2x16x32xf32, #tpu.memory_space<vmem>>, vector<1x16x32xf32>,
    %c1 = arith.constant 1 : index
    %c0_24 = arith.constant 0 : index
    %c0_25 = arith.constant 0 : index
    %52 = vector.load %arg1[%c1, %c0_24, %c0_25] : memref<2x17x32xf32, #tpu.memory_space<vmem>>, vector<1x17x32xf32>
    %53 = vector.shape_cast %52 : vector<1x17x32xf32> to vector<17x32xf32>
    %54 = arith.truncf %53 : vector<17x32xf32> to vector<17x32xbf16>
    %cst_26 = arith.constant dense<0.000000e+00> : vector<17x32xf32>
    %55 = tpu.matmul %54, %0, %cst_26 {dimension_numbers = #tpu.dot_dimension_numbers<[1], [0], [0], [1], [0, 0, 1, 1], [], []>} : vector<17x32xbf16>, vector<32x32xbf16>, vector<17x32xf32> -> vector<17x32xf32>
    %c1_27 = arith.constant 1 : index
    %c0_28 = arith.constant 0 : index
    %c0_29 = arith.constant 0 : index
    %56 = vector.load %arg3[%c1_27, %c0_28, %c0_29] : memref<2x1x32xf32, #tpu.memory_space<vmem>>, vector<1x1x32xf32>
    %57 = vector.shape_cast %56 : vector<1x1x32xf32> to vector<1x32xf32>
    %58 = vector.broadcast %57 : vector<1x32xf32> to vector<17x32xf32>
    %59 = arith.addf %55, %58 : vector<17x32xf32>
    %cst_30 = arith.constant 5.000000e-01 : f32
    %60 = vector.broadcast %cst_30 : f32 to vector<17x32xf32>
    %61 = arith.mulf %60, %59 : vector<17x32xf32>
    %cst_31 = arith.constant 0.707106769 : f32
    %62 = vector.broadcast %cst_31 : f32 to vector<17x32xf32>
    %63 = arith.mulf %59, %62 : vector<17x32xf32>
    %64 = math.absf %63 : vector<17x32xf32>
    %cst_32 = arith.constant 0.327591091 : f32
    %65 = vector.broadcast %cst_32 : f32 to vector<17x32xf32>
    %66 = arith.mulf %65, %64 : vector<17x32xf32>
    %cst_33 = arith.constant 1.000000e+00 : f32
    %67 = vector.broadcast %cst_33 : f32 to vector<17x32xf32>
    %68 = arith.addf %67, %66 : vector<17x32xf32>
    %69 = tpu.reciprocal %68 {approx = true} : vector<17x32xf32> -> vector<17x32xf32>
    %cst_34 = arith.constant 1.06140542 : f32
    %70 = vector.broadcast %cst_34 : f32 to vector<17x32xf32>
    %71 = arith.mulf %70, %69 : vector<17x32xf32>
    %cst_35 = arith.constant -1.45315206 : f32
    %72 = vector.broadcast %cst_35 : f32 to vector<17x32xf32>
    %73 = arith.addf %71, %72 : vector<17x32xf32>
    %74 = arith.mulf %73, %69 : vector<17x32xf32>
    %cst_36 = arith.constant 1.42141378 : f32
    %75 = vector.broadcast %cst_36 : f32 to vector<17x32xf32>
    %76 = arith.addf %74, %75 : vector<17x32xf32>
    %77 = arith.mulf %76, %69 : vector<17x32xf32>
    %cst_37 = arith.constant -0.284496725 : f32
    %78 = vector.broadcast %cst_37 : f32 to vector<17x32xf32>
    %79 = arith.addf %77, %78 : vector<17x32xf32>
    %80 = arith.mulf %79, %69 : vector<17x32xf32>
    %cst_38 = arith.constant 0.254829586 : f32
    %81 = vector.broadcast %cst_38 : f32 to vector<17x32xf32>
    %82 = arith.addf %80, %81 : vector<17x32xf32>
    %83 = arith.mulf %82, %69 : vector<17x32xf32>
    %84 = arith.mulf %64, %64 : vector<17x32xf32>
    %cst_39 = arith.constant 0.000000e+00 : f32
    %85 = vector.broadcast %cst_39 : f32 to vector<17x32xf32>
    %86 = arith.subf %85, %84 : vector<17x32xf32>
    %87 = math.exp %86 : vector<17x32xf32>
    %88 = arith.mulf %83, %87 : vector<17x32xf32>
    %cst_40 = arith.constant 1.000000e+00 : f32
    %89 = vector.broadcast %cst_40 : f32 to vector<17x32xf32>
    %90 = arith.subf %89, %88 : vector<17x32xf32>
    %cst_41 = arith.constant 0.000000e+00 : f32
    %91 = vector.broadcast %cst_41 : f32 to vector<17x32xf32>
    %92 = arith.cmpf olt, %63, %91 : vector<17x32xf32>
    %cst_42 = arith.constant 0.000000e+00 : f32
    %93 = vector.broadcast %cst_42 : f32 to vector<17x32xf32>
    %94 = arith.subf %93, %90 : vector<17x32xf32>
    %95 = arith.select %92, %94, %90 : vector<17x32xi1>, vector<17x32xf32>
    %cst_43 = arith.constant 1.000000e+00 : f32
    %96 = vector.broadcast %cst_43 : f32 to vector<17x32xf32>
    %97 = arith.addf %96, %95 : vector<17x32xf32>
    %98 = arith.mulf %61, %97 : vector<17x32xf32>
    %99 = vector.extract_strided_slice %98 {offsets = [1, 0], sizes = [16, 32], strides = [1, 1]} : vector<17x32xf32> to vector<16x32xf32>
    %c1_44 = arith.constant 1 : index
    %c0_45 = arith.constant 0 : index
    %c0_46 = arith.constant 0 : index
    %100 = vector.load %arg4[%c1_44, %c0_45, %c0_46] : memref<2x16x32xf32, #tpu.memory_space<vmem>>, vector<1x16x32xf32>
    %101 = vector.shape_cast %100 : vector<1x16x32xf32> to vector<16x32xf32>
    %102 = vector.shape_cast %99 : vector<16x32xf32> to vector<1x16x32xf32>
    tpu.vector_store %arg4[%c1_44, %c0_45, %c0_46], %102 {strides = array<i32>} : memref<2x16x32xf32, #tpu.memory_space<vmem>>, vector<1x16x32xf32>,
    return
  }
  func.func @transform_0(%arg0: i32) -> (i32, i32, i32) {
    %c0_i32 = arith.constant 0 : i32
    %c0_i32_0 = arith.constant 0 : i32
    %c0_i32_1 = arith.constant 0 : i32
    return %arg0, %c0_i32, %c0_i32_0 : i32, i32, i32
  }
  func.func @transform_1(%arg0: i32) -> (i32, i32) {
    %c0_i32 = arith.constant 0 : i32
    %c0_i32_0 = arith.constant 0 : i32
    %c0_i32_1 = arith.constant 0 : i32
    return %c0_i32, %c0_i32_0 : i32, i32
  }
  func.func @transform_2(%arg0: i32) -> (i32, i32, i32) {
    %c0_i32 = arith.constant 0 : i32
    %c0_i32_0 = arith.constant 0 : i32
    %c0_i32_1 = arith.constant 0 : i32
    return %arg0, %c0_i32, %c0_i32_0 : i32, i32, i32
  }
  func.func @transform_3(%arg0: i32) -> (i32, i32, i32) {
    %c0_i32 = arith.constant 0 : i32
    %c0_i32_0 = arith.constant 0 : i32
    %c0_i32_1 = arith.constant 0 : i32
    return %arg0, %c0_i32, %c0_i32_0 : i32, i32, i32
  }
}

</mosaic_0001>

<llo_original>
// kernel: tpu_custom_call.1
$region0: #{tpu_custom_call.1}
  #allocation0 [shape = 'u32[]', space=smem, size = 0x4, offset = 0x4, fixed_abs, tag = 'smem constant byte address 0x4 - core index']
  #allocation1 [shape = 'u32[144,128]{1,0:T(1,128)}', space=vmem, size = 0x12000, scoped, tag = 'internal scratch']
  %s0 = inlined_call_operand.vmem [shape: f32[2,17,32], index: 0, kind: input, shape index: {}]
  %s1 = inlined_call_operand.vmem [shape: bf16[32,32], index: 1, kind: input, shape index: {}]
  %s2 = inlined_call_operand.vmem [shape: f32[2,1,32], index: 2, kind: input, shape index: {}]
  %s3 = inlined_call_operand.hbm [shape: f32[2,16,32], index: 3, kind: output, shape index: {}]
  %s4 = sld [smem:[#allocation0]]
  $region22: #{tpu_custom_call.1} parent=0
    _
  %s6 = ssub.s32 1, %s4
  %s7 = scalar_select 0, %s6, %s4
  $region1: #{tpu_custom_call.1} parent=0
    #allocation2 [shape = 'u8[16384]{0}', space=vmem, size = 0x4000, scoped, tag = 'output window, operand 0, single buffered']
    #allocation3 [shape = 's32[1]{0}', space=sflag, size = 0x4, scoped, tag = 'scoped memory for tpu_custom_call.1']
    %8 = vsyncpa [#allocation3], 0
    // Predicated region
    $region2: #{tpu_custom_call.1} parent=1 // pred_check
      _
    $region3: #{tpu_custom_call.1} parent=1 // pred_check_branch
      %10 = sbr.rel (0) target = $region5
    $region4: #{tpu_custom_call.1} parent=1 // pred_region
      _
    $region5: #{tpu_custom_call.1} parent=1 // pred_fallthru
      _
    // Predicated region
    $region6: #{tpu_custom_call.1} parent=1 // pred_check
      _
    $region7: #{tpu_custom_call.1} parent=1 // pred_check_branch
      %12 = sbr.rel (0) target = $region9
    $region8: #{tpu_custom_call.1} parent=1 // pred_region
      _
    $region9: #{tpu_custom_call.1} parent=1 // pred_fallthru
      _
    // Predicated region
    $region10: #{tpu_custom_call.1} parent=1 // pred_check
      _
    $region11: #{tpu_custom_call.1} parent=1 // pred_check_branch
      %14 = sbr.rel (0) target = $region13
    $region12: #{tpu_custom_call.1} parent=1 // pred_region
      _
    $region13: #{tpu_custom_call.1} parent=1 // pred_fallthru
      _
    %v16 = vld [vmem:[%s1] sm:$0xf]
    %v17 = vld [vmem:[%s1 + $0x4] sm:$0xf]
    %v18 = vld [vmem:[%s1 + $0x8] sm:$0xf]
    %v19 = vld [vmem:[%s1 + $0xc] sm:$0xf]
    %v20 = vld [vmem:[%s0] sm:$0xff]
    %v21 = vld [vmem:[%s0 + $0x8] sm:$0xff]
    %v22 = vld [vmem:[%s0 + $0x10] sm:$0x1]
    %v23 = vpack.c.bf16 %v21, %v20
    %v24 = vpack.c.bf16 %v22, %v22
    %v25 = vld [vmem:[%s2] sm:$0x1]
    %v27 = vlaneseq
    %v28 = vshrl.u32 %v27, 7
    %v29 = vsub.s32 0, %v28
    %v30 = vrot.slane %v25, %v29
    %v36 = vunpack.c.l.b16 %v16
    %v37 = vunpack.c.l.b16 %v17
    %v38 = vunpack.c.l.b16 %v18
    %v39 = vunpack.c.l.b16 %v19
    %v40 = vpack.c.b16 %v37, %v36
    %v41 = vpack.c.b16 %v39, %v38
    %vm44 = vcmask 261120
    %v46 = vsel %vm44, %v23, 0
    %v49 = vsel %vm44, %v24, 0
    %51 = vmatprep.subr.bf16.mxu0 0
    %52 = vmatpush1.bf16.msra.mxu0 %v40
    %53 = vmatprep.subr.bf16.mxu0 0
    %54 = vmatpush1.bf16.msra.mxu0 %v41
    %55 = vmatprep.subr.bf16.mxu0 0
    %56 = vmatpush1.bf16.msra.mxu0 0
    %57 = vmatprep.subr.bf16.mxu0 0
    %58 = vmatpush1.bf16.msra.mxu0 0
    %59 = vmatprep.subr.bf16.mxu0 0
    %60 = vmatpush1.bf16.msra.mxu0 0
    %61 = vmatprep.subr.bf16.mxu0 0
    %62 = vmatpush1.bf16.msra.mxu0 0
    %63 = vmatprep.subr.bf16.mxu0 0
    %64 = vmatpush1.bf16.msra.mxu0 0
    %65 = vmatprep.subr.bf16.mxu0 0
    %66 = vmatpush1.bf16.msra.mxu0 0
    %67 = vmatprep.subr.bf16.mxu0 0
    %68 = vmatpush1.bf16.msra.mxu0 0
    %69 = vmatprep.subr.bf16.mxu0 0
    %70 = vmatpush1.bf16.msra.mxu0 0
    %71 = vmatprep.subr.bf16.mxu0 0
    %72 = vmatpush1.bf16.msra.mxu0 0
    %73 = vmatprep.subr.bf16.mxu0 0
    %74 = vmatpush1.bf16.msra.mxu0 0
    %75 = vmatprep.subr.bf16.mxu0 0
    %76 = vmatpush1.bf16.msra.mxu0 0
    %77 = vmatprep.subr.bf16.mxu0 0
    %78 = vmatpush1.bf16.msra.mxu0 0
    %79 = vmatprep.subr.bf16.mxu0 0
    %80 = vmatpush1.bf16.msra.mxu0 0
    %81 = vmatprep.subr.bf16.mxu0 0
    %82 = vmatpush1.bf16.msra.mxu0 0
    %83 = vmatprep.mubr.bf16.mxu0 0
    %84 = vmatmul.mubr.bf16.gmra.mrb[0].mxu0 %v46
    %v85 = vpop.f32.mrb[0].mxu0
    %v86 = vadd.f32 %v30, %v85
    %v87 = vpop.f32.mrb[0].mxu0
    %v88 = vpop.f32.mrb[0].mxu0
    %v89 = vadd.f32 %v30, %v88
    %v90 = vpop.f32.mrb[0].mxu0
    %91 = vmatprep.mubr.bf16.mxu0 0
    %92 = vmatmul.mubr.bf16.gmra.mrb[0].mxu0 %v49
    %v93 = vpop.f32.mrb[0].mxu0
    %v94 = vadd.f32 %v30, %v93
    %v95 = vpop.f32.mrb[0].mxu0
    %v96 = vpop.f32.mrb[0].mxu0
    %v97 = vpop.f32.mrb[0].mxu0
    %98 = vdwg.mxu0
    %v99 = vmul.f32 %v86, 0.5
    %v100 = vmul.f32 %v89, 0.5
    %v101 = vmul.f32 %v94, 0.5
    %v102 = vmul.f32 %v86, 0.70710677
    %v103 = vmul.f32 %v89, 0.70710677
    %v104 = vmul.f32 %v94, 0.70710677
    %v105 = vand.u32 2147483647, %v102
    %v106 = vand.u32 2147483647, %v103
    %v107 = vand.u32 2147483647, %v104
    %v108 = vmul.f32 %v105, 0.3275911
    %v109 = vmul.f32 %v106, 0.3275911
    %v110 = vmul.f32 %v107, 0.3275911
    %v111 = vadd.f32 %v108, 1.0
    %v112 = vadd.f32 %v109, 1.0
    %v113 = vadd.f32 %v110, 1.0
    %v114 = vrcp.pop %v111
    %v115 = vrcp.pop %v112
    %v116 = vrcp.pop %v113
    %v117 = vmul.f32 %v114, 1.0614054
    %v118 = vmul.f32 %v115, 1.0614054
    %v119 = vmul.f32 %v116, 1.0614054
    %v120 = vadd.f32 %v117, -1.4531521
    %v121 = vadd.f32 %v118, -1.4531521
    %v122 = vadd.f32 %v119, -1.4531521
    %v123 = vmul.f32 %v120, %v114
    %v124 = vmul.f32 %v121, %v115
    %v125 = vmul.f32 %v122, %v116
    %v126 = vadd.f32 %v123, 1.4214138
    %v127 = vadd.f32 %v124, 1.4214138
    %v128 = vadd.f32 %v125, 1.4214138
    %v129 = vmul.f32 %v126, %v114
    %v130 = vmul.f32 %v127, %v115
    %v131 = vmul.f32 %v128, %v116
    %v132 = vadd.f32 %v129, -0.28449672
    %v133 = vadd.f32 %v130, -0.28449672
    %v134 = vadd.f32 %v131, -0.28449672
    %v135 = vmul.f32 %v132, %v114
    %v136 = vmul.f32 %v133, %v115
    %v137 = vmul.f32 %v134, %v116
    %v138 = vadd.f32 %v135, 0.2548296
    %v139 = vadd.f32 %v136, 0.2548296
    %v140 = vadd.f32 %v137, 0.2548296
    %v141 = vmul.f32 %v138, %v114
    %v142 = vmul.f32 %v139, %v115
    %v143 = vmul.f32 %v140, %v116
    %v144 = vmul.f32 %v105, %v105
    %v145 = vmul.f32 %v106, %v106
    %v146 = vmul.f32 %v107, %v107
    %v147 = vsub.f32 0.0, %v144
    %v148 = vsub.f32 0.0, %v145
    %v149 = vsub.f32 0.0, %v146
    %v150 = vmul.f32 %v147, 1.442695
    %v151 = vpow.pop %v150
    %v152 = vmul.f32 %v148, 1.442695
    %v153 = vpow.pop %v152
    %v154 = vmul.f32 %v149, 1.442695
    %v155 = vpow.pop %v154
    %v156 = vmul.f32 %v141, %v151
    %v157 = vmul.f32 %v142, %v153
    %v158 = vmul.f32 %v143, %v155
    %v159 = vsub.f32 1.0, %v156
    %v160 = vsub.f32 1.0, %v157
    %v161 = vsub.f32 1.0, %v158
    %vm162 = vcmp.lt.f32.partialorder %v102, 0.0
    %vm163 = vcmp.lt.f32.partialorder %v103, 0.0
    %vm164 = vcmp.lt.f32.partialorder %v104, 0.0
    %v165 = vsub.f32 0.0, %v159
    %v166 = vsub.f32 0.0, %v160
    %v167 = vsub.f32 0.0, %v161
    %v168 = vsel %vm162, %v165, %v159
    %v169 = vsel %vm163, %v166, %v160
    %v170 = vsel %vm164, %v167, %v161
    %v171 = vadd.f32 %v168, 1.0
    %v172 = vadd.f32 %v169, 1.0
    %v173 = vadd.f32 %v170, 1.0
    %v174 = vmul.f32 %v99, %v171
    %v175 = vmul.f32 %v100, %v172
    %v176 = vmul.f32 %v101, %v173
    %vm177 = vcmask 261121
    %178 = vst.msk [vmem:[#allocation2 - $0x1] sm:$0xfe] %vm177, %v174
    %179 = vst.msk [vmem:[#allocation2 + $0x7] sm:$0xff] %vm44, %v175
    %vm180 = vcmask 253952
    %181 = vst.msk [vmem:[#allocation2 + $0xf] sm:$0x1] %vm180, %v176
    %s182 = scalar_lea.vmem %s0, 24
    %v183 = vld [vmem:[%s182] sm:$0xff]
    %v184 = vld [vmem:[%s182 + $0x8] sm:$0xff]
    %v185 = vld [vmem:[%s182 + $0x10] sm:$0x1]
    %v186 = vpack.c.bf16 %v184, %v183
    %v187 = vpack.c.bf16 %v185, %v185
    %s188 = scalar_lea.vmem %s2, 1
    %v189 = vld [vmem:[%s188] sm:$0x1]
    %v191 = vlaneseq
    %v192 = vshrl.u32 %v191, 7
    %v193 = vsub.s32 0, %v192
    %v194 = vrot.slane %v189, %v193
    %v197 = vsel %vm44, %v186, 0
    %v200 = vsel %vm44, %v187, 0
    %202 = vmatprep.subr.bf16.mxu0 0
    %203 = vmatpush1.bf16.msra.mxu0 %v40
    %204 = vmatprep.subr.bf16.mxu0 0
    %205 = vmatpush1.bf16.msra.mxu0 %v41
    %206 = vmatprep.subr.bf16.mxu0 0
    %207 = vmatpush1.bf16.msra.mxu0 0
    %208 = vmatprep.subr.bf16.mxu0 0
    %209 = vmatpush1.bf16.msra.mxu0 0
    %210 = vmatprep.subr.bf16.mxu0 0
    %211 = vmatpush1.bf16.msra.mxu0 0
    %212 = vmatprep.subr.bf16.mxu0 0
    %213 = vmatpush1.bf16.msra.mxu0 0
    %214 = vmatprep.subr.bf16.mxu0 0
    %215 = vmatpush1.bf16.msra.mxu0 0
    %216 = vmatprep.subr.bf16.mxu0 0
    %217 = vmatpush1.bf16.msra.mxu0 0
    %218 = vmatprep.subr.bf16.mxu0 0
    %219 = vmatpush1.bf16.msra.mxu0 0
    %220 = vmatprep.subr.bf16.mxu0 0
    %221 = vmatpush1.bf16.msra.mxu0 0
    %222 = vmatprep.subr.bf16.mxu0 0
    %223 = vmatpush1.bf16.msra.mxu0 0
    %224 = vmatprep.subr.bf16.mxu0 0
    %225 = vmatpush1.bf16.msra.mxu0 0
    %226 = vmatprep.subr.bf16.mxu0 0
    %227 = vmatpush1.bf16.msra.mxu0 0
    %228 = vmatprep.subr.bf16.mxu0 0
    %229 = vmatpush1.bf16.msra.mxu0 0
    %230 = vmatprep.subr.bf16.mxu0 0
    %231 = vmatpush1.bf16.msra.mxu0 0
    %232 = vmatprep.subr.bf16.mxu0 0
    %233 = vmatpush1.bf16.msra.mxu0 0
    %234 = vmatprep.mubr.bf16.mxu0 0
    %235 = vmatmul.mubr.bf16.gmra.mrb[0].mxu0 %v197
    %v236 = vpop.f32.mrb[0].mxu0
    %v237 = vadd.f32 %v194, %v236
    %v238 = vpop.f32.mrb[0].mxu0
    %v239 = vpop.f32.mrb[0].mxu0
    %v240 = vadd.f32 %v194, %v239
    %v241 = vpop.f32.mrb[0].mxu0
    %242 = vmatprep.mubr.bf16.mxu0 0
    %243 = vmatmul.mubr.bf16.gmra.mrb[0].mxu0 %v200
    %v244 = vpop.f32.mrb[0].mxu0
    %v245 = vadd.f32 %v194, %v244
    %v246 = vpop.f32.mrb[0].mxu0
    %v247 = vpop.f32.mrb[0].mxu0
    %v248 = vpop.f32.mrb[0].mxu0
    %249 = vdwg.mxu0
    %v250 = vmul.f32 %v237, 0.5
    %v251 = vmul.f32 %v240, 0.5
    %v252 = vmul.f32 %v245, 0.5
    %v253 = vmul.f32 %v237, 0.70710677
    %v254 = vmul.f32 %v240, 0.70710677
    %v255 = vmul.f32 %v245, 0.70710677
    %v256 = vand.u32 2147483647, %v253
    %v257 = vand.u32 2147483647, %v254
    %v258 = vand.u32 2147483647, %v255
    %v259 = vmul.f32 %v256, 0.3275911
    %v260 = vmul.f32 %v257, 0.3275911
    %v261 = vmul.f32 %v258, 0.3275911
    %v262 = vadd.f32 %v259, 1.0
    %v263 = vadd.f32 %v260, 1.0
    %v264 = vadd.f32 %v261, 1.0
    %v265 = vrcp.pop %v262
    %v266 = vrcp.pop %v263
    %v267 = vrcp.pop %v264
    %v268 = vmul.f32 %v265, 1.0614054
    %v269 = vmul.f32 %v266, 1.0614054
    %v270 = vmul.f32 %v267, 1.0614054
    %v271 = vadd.f32 %v268, -1.4531521
    %v272 = vadd.f32 %v269, -1.4531521
    %v273 = vadd.f32 %v270, -1.4531521
    %v274 = vmul.f32 %v271, %v265
    %v275 = vmul.f32 %v272, %v266
    %v276 = vmul.f32 %v273, %v267
    %v277 = vadd.f32 %v274, 1.4214138
    %v278 = vadd.f32 %v275, 1.4214138
    %v279 = vadd.f32 %v276, 1.4214138
    %v280 = vmul.f32 %v277, %v265
    %v281 = vmul.f32 %v278, %v266
    %v282 = vmul.f32 %v279, %v267
    %v283 = vadd.f32 %v280, -0.28449672
    %v284 = vadd.f32 %v281, -0.28449672
    %v285 = vadd.f32 %v282, -0.28449672
    %v286 = vmul.f32 %v283, %v265
    %v287 = vmul.f32 %v284, %v266
    %v288 = vmul.f32 %v285, %v267
    %v289 = vadd.f32 %v286, 0.2548296
    %v290 = vadd.f32 %v287, 0.2548296
    %v291 = vadd.f32 %v288, 0.2548296
    %v292 = vmul.f32 %v289, %v265
    %v293 = vmul.f32 %v290, %v266
    %v294 = vmul.f32 %v291, %v267
    %v295 = vmul.f32 %v256, %v256
    %v296 = vmul.f32 %v257, %v257
    %v297 = vmul.f32 %v258, %v258
    %v298 = vsub.f32 0.0, %v295
    %v299 = vsub.f32 0.0, %v296
    %v300 = vsub.f32 0.0, %v297
    %v301 = vmul.f32 %v298, 1.442695
    %v302 = vpow.pop %v301
    %v303 = vmul.f32 %v299, 1.442695
    %v304 = vpow.pop %v303
    %v305 = vmul.f32 %v300, 1.442695
    %v306 = vpow.pop %v305
    %v307 = vmul.f32 %v292, %v302
    %v308 = vmul.f32 %v293, %v304
    %v309 = vmul.f32 %v294, %v306
    %v310 = vsub.f32 1.0, %v307
    %v311 = vsub.f32 1.0, %v308
    %v312 = vsub.f32 1.0, %v309
    %vm313 = vcmp.lt.f32.partialorder %v253, 0.0
    %vm314 = vcmp.lt.f32.partialorder %v254, 0.0
    %vm315 = vcmp.lt.f32.partialorder %v255, 0.0
    %v316 = vsub.f32 0.0, %v310
    %v317 = vsub.f32 0.0, %v311
    %v318 = vsub.f32 0.0, %v312
    %v319 = vsel %vm313, %v316, %v310
    %v320 = vsel %vm314, %v317, %v311
    %v321 = vsel %vm315, %v318, %v312
    %v322 = vadd.f32 %v319, 1.0
    %v323 = vadd.f32 %v320, 1.0
    %v324 = vadd.f32 %v321, 1.0
    %v325 = vmul.f32 %v250, %v322
    %v326 = vmul.f32 %v251, %v323
    %v327 = vmul.f32 %v252, %v324
    %s328 = scalar_lea.vmem [#allocation2], 16
    %329 = vst.msk [vmem:[%s328 - $0x1] sm:$0xfe] %vm177, %v325
    %330 = vst.msk [vmem:[%s328 + $0x7] sm:$0xff] %vm44, %v326
    %331 = vst.msk [vmem:[%s328 + $0xf] sm:$0x1] %vm180, %v327
    // Predicated region
    $region14: #{tpu_custom_call.1} parent=1 // pred_check
      _
    $region15: #{tpu_custom_call.1} parent=1 // pred_check_branch
      %333 = sbr.rel (0) target = $region17
    $region16: #{tpu_custom_call.1} parent=1 // pred_region
      %s335 = ssub.s32 512, 512
      %336 = vsyncadd [#allocation3], %s335
      %s337 = sshll.u32 [#allocation2], 4
      %s338 = int_to_ptr.vmem [resolvable:$true] %s337
      %343 = dma.vmem_to_hbm [thread:$0]  %s338, 512, %s3, [#allocation3], 128, 128, 8
    $region17: #{tpu_custom_call.1} parent=1 // pred_fallthru
      _
    // Predicated region
    $region18: #{tpu_custom_call.1} parent=1 // pred_check
      _
    $region19: #{tpu_custom_call.1} parent=1 // pred_check_branch
      %345 = sbr.rel (0) target = $region21
    $region20: #{tpu_custom_call.1} parent=1 // pred_region
      %346 = dma.done [#allocation3], 512
    $region21: #{tpu_custom_call.1} parent=1 // pred_fallthru
      _
    %347 = vsyncpa [#allocation3], 1

// kernel: tpu_custom_call.1
$region0: #{tpu_custom_call.1}
  #allocation0 [shape = 'u32[]', space=smem, size = 0x4, offset = 0x4, fixed_abs, tag = 'smem constant byte address 0x4 - core index']
  #allocation1 [shape = 'u32[144,128]{1,0:T(1,128)}', space=vmem, size = 0x12000, scoped, tag = 'internal scratch']
  %s0 = inlined_call_operand.vmem [shape: f32[2,17,32], index: 0, kind: input, shape index: {}]
  %s1 = inlined_call_operand.vmem [shape: bf16[32,32], index: 1, kind: input, shape index: {}]
  %s2 = inlined_call_operand.vmem [shape: f32[2,1,32], index: 2, kind: input, shape index: {}]
  %s3 = inlined_call_operand.hbm [shape: f32[2,16,32], index: 3, kind: output, shape index: {}]
  %s4 = sld [smem:[#allocation0]]
  $region22: #{tpu_custom_call.1} parent=0
    _
  %s6 = ssub.s32 1, %s4
  %s7 = scalar_select 0, %s6, %s4
  $region1: #{tpu_custom_call.1} parent=0
    #allocation2 [shape = 'u8[16384]{0}', space=vmem, size = 0x4000, scoped, tag = 'output window, operand 0, single buffered']
    #allocation3 [shape = 's32[1]{0}', space=sflag, size = 0x4, scoped, tag = 'scoped memory for tpu_custom_call.1']
    %8 = vsyncpa [#allocation3], 0
    // Predicated region
    $region2: #{tpu_custom_call.1} parent=1 // pred_check
      _
    $region3: #{tpu_custom_call.1} parent=1 // pred_check_branch
      %10 = sbr.rel (0) target = $region5
    $region4: #{tpu_custom_call.1} parent=1 // pred_region
      _
    $region5: #{tpu_custom_call.1} parent=1 // pred_fallthru
      _
    // Predicated region
    $region6: #{tpu_custom_call.1} parent=1 // pred_check
      _
    $region7: #{tpu_custom_call.1} parent=1 // pred_check_branch
      %12 = sbr.rel (0) target = $region9
    $region8: #{tpu_custom_call.1} parent=1 // pred_region
      _
    $region9: #{tpu_custom_call.1} parent=1 // pred_fallthru
      _
    // Predicated region
    $region10: #{tpu_custom_call.1} parent=1 // pred_check
      _
    $region11: #{tpu_custom_call.1} parent=1 // pred_check_branch
      %14 = sbr.rel (0) target = $region13
    $region12: #{tpu_custom_call.1} parent=1 // pred_region
      _
    $region13: #{tpu_custom_call.1} parent=1 // pred_fallthru
      _
    %v16 = vld [vmem:[%s1] sm:$0xf]
    %v17 = vld [vmem:[%s1 + $0x4] sm:$0xf]
    %v18 = vld [vmem:[%s1 + $0x8] sm:$0xf]
    %v19 = vld [vmem:[%s1 + $0xc] sm:$0xf]
    %v20 = vld [vmem:[%s0] sm:$0xff]
    %v21 = vld [vmem:[%s0 + $0x8] sm:$0xff]
    %v22 = vld [vmem:[%s0 + $0x10] sm:$0x1]
    %v23 = vpack.c.bf16 %v21, %v20
    %v24 = vpack.c.bf16 %v22, %v22
    %v25 = vld [vmem:[%s2] sm:$0x1]
    %v27 = vlaneseq
    %v28 = vshrl.u32 %v27, 7
    %v29 = vsub.s32 0, %v28
    %v30 = vrot.slane %v25, %v29
    %v36 = vunpack.c.l.b16 %v16
    %v37 = vunpack.c.l.b16 %v17
    %v38 = vunpack.c.l.b16 %v18
    %v39 = vunpack.c.l.b16 %v19
    %v40 = vpack.c.b16 %v37, %v36
    %v41 = vpack.c.b16 %v39, %v38
    %vm44 = vcmask 261120
    %v46 = vsel %vm44, %v23, 0
    %v49 = vsel %vm44, %v24, 0
    %51 = vmatprep.subr.bf16.mxu0 0
    %52 = vmatpush1.bf16.msra.mxu0 %v40
    %53 = vmatprep.subr.bf16.mxu0 0
    %54 = vmatpush1.bf16.msra.mxu0 %v41
    %55 = vmatprep.subr.bf16.mxu0 0
    %56 = vmatpush1.bf16.msra.mxu0 0
    %57 = vmatprep.subr.bf16.mxu0 0
    %58 = vmatpush1.bf16.msra.mxu0 0
    %59 = vmatprep.subr.bf16.mxu0 0
    %60 = vmatpush1.bf16.msra.mxu0 0
    %61 = vmatprep.subr.bf16.mxu0 0
    %62 = vmatpush1.bf16.msra.mxu0 0
    %63 = vmatprep.subr.bf16.mxu0 0
    %64 = vmatpush1.bf16.msra.mxu0 0
    %65 = vmatprep.subr.bf16.mxu0 0
    %66 = vmatpush1.bf16.msra.mxu0 0
    %67 = vmatprep.subr.bf16.mxu0 0
    %68 = vmatpush1.bf16.msra.mxu0 0
    %69 = vmatprep.subr.bf16.mxu0 0
    %70 = vmatpush1.bf16.msra.mxu0 0
    %71 = vmatprep.subr.bf16.mxu0 0
    %72 = vmatpush1.bf16.msra.mxu0 0
    %73 = vmatprep.subr.bf16.mxu0 0
    %74 = vmatpush1.bf16.msra.mxu0 0
    %75 = vmatprep.subr.bf16.mxu0 0
    %76 = vmatpush1.bf16.msra.mxu0 0
    %77 = vmatprep.subr.bf16.mxu0 0
    %78 = vmatpush1.bf16.msra.mxu0 0
    %79 = vmatprep.subr.bf16.mxu0 0
    %80 = vmatpush1.bf16.msra.mxu0 0
    %81 = vmatprep.subr.bf16.mxu0 0
    %82 = vmatpush1.bf16.msra.mxu0 0
    %83 = vmatprep.mubr.bf16.mxu0 0
    %84 = vmatmul.mubr.bf16.gmra.mrb[0].mxu0 %v46
    %v85 = vpop.f32.mrb[0].mxu0
    %v86 = vadd.f32 %v30, %v85
    %v87 = vpop.f32.mrb[0].mxu0
    %v88 = vpop.f32.mrb[0].mxu0
    %v89 = vadd.f32 %v30, %v88
    %v90 = vpop.f32.mrb[0].mxu0
    %91 = vmatprep.mubr.bf16.mxu0 0
    %92 = vmatmul.mubr.bf16.gmra.mrb[0].mxu0 %v49
    %v93 = vpop.f32.mrb[0].mxu0
    %v94 = vadd.f32 %v30, %v93
    %v95 = vpop.f32.mrb[0].mxu0
    %v96 = vpop.f32.mrb[0].mxu0
    %v97 = vpop.f32.mrb[0].mxu0
    %98 = vdwg.mxu0
    %v99 = vmul.f32 %v86, 0.5
    %v100 = vmul.f32 %v89, 0.5
    %v101 = vmul.f32 %v94, 0.5
    %v102 = vmul.f32 %v86, 0.70710677
    %v103 = vmul.f32 %v89, 0.70710677
    %v104 = vmul.f32 %v94, 0.70710677
    %v105 = vand.u32 2147483647, %v102
    %v106 = vand.u32 2147483647, %v103
    %v107 = vand.u32 2147483647, %v104
    %v108 = vmul.f32 %v105, 0.3275911
    %v109 = vmul.f32 %v106, 0.3275911
    %v110 = vmul.f32 %v107, 0.3275911
    %v111 = vadd.f32 %v108, 1.0
    %v112 = vadd.f32 %v109, 1.0
    %v113 = vadd.f32 %v110, 1.0
    %v114 = vrcp.pop %v111
    %v115 = vrcp.pop %v112
    %v116 = vrcp.pop %v113
    %v117 = vmul.f32 %v114, 1.0614054
    %v118 = vmul.f32 %v115, 1.0614054
    %v119 = vmul.f32 %v116, 1.0614054
    %v120 = vadd.f32 %v117, -1.4531521
    %v121 = vadd.f32 %v118, -1.4531521
    %v122 = vadd.f32 %v119, -1.4531521
    %v123 = vmul.f32 %v120, %v114
    %v124 = vmul.f32 %v121, %v115
    %v125 = vmul.f32 %v122, %v116
    %v126 = vadd.f32 %v123, 1.4214138
    %v127 = vadd.f32 %v124, 1.4214138
    %v128 = vadd.f32 %v125, 1.4214138
    %v129 = vmul.f32 %v126, %v114
    %v130 = vmul.f32 %v127, %v115
    %v131 = vmul.f32 %v128, %v116
    %v132 = vadd.f32 %v129, -0.28449672
    %v133 = vadd.f32 %v130, -0.28449672
    %v134 = vadd.f32 %v131, -0.28449672
    %v135 = vmul.f32 %v132, %v114
    %v136 = vmul.f32 %v133, %v115
    %v137 = vmul.f32 %v134, %v116
    %v138 = vadd.f32 %v135, 0.2548296
    %v139 = vadd.f32 %v136, 0.2548296
    %v140 = vadd.f32 %v137, 0.2548296
    %v141 = vmul.f32 %v138, %v114
    %v142 = vmul.f32 %v139, %v115
    %v143 = vmul.f32 %v140, %v116
    %v144 = vmul.f32 %v105, %v105
    %v145 = vmul.f32 %v106, %v106
    %v146 = vmul.f32 %v107, %v107
    %v147 = vsub.f32 0.0, %v144
    %v148 = vsub.f32 0.0, %v145
    %v149 = vsub.f32 0.0, %v146
    %v150 = vmul.f32 %v147, 1.442695
    %v151 = vpow.pop %v150
    %v152 = vmul.f32 %v148, 1.442695
    %v153 = vpow.pop %v152
    %v154 = vmul.f32 %v149, 1.442695
    %v155 = vpow.pop %v154
    %v156 = vmul.f32 %v141, %v151
    %v157 = vmul.f32 %v142, %v153
    %v158 = vmul.f32 %v143, %v155
    %v159 = vsub.f32 1.0, %v156
    %v160 = vsub.f32 1.0, %v157
    %v161 = vsub.f32 1.0, %v158
    %vm162 = vcmp.lt.f32.partialorder %v102, 0.0
    %vm163 = vcmp.lt.f32.partialorder %v103, 0.0
    %vm164 = vcmp.lt.f32.partialorder %v104, 0.0
    %v165 = vsub.f32 0.0, %v159
    %v166 = vsub.f32 0.0, %v160
    %v167 = vsub.f32 0.0, %v161
    %v168 = vsel %vm162, %v165, %v159
    %v169 = vsel %vm163, %v166, %v160
    %v170 = vsel %vm164, %v167, %v161
    %v171 = vadd.f32 %v168, 1.0
    %v172 = vadd.f32 %v169, 1.0
    %v173 = vadd.f32 %v170, 1.0
    %v174 = vmul.f32 %v99, %v171
    %v175 = vmul.f32 %v100, %v172
    %v176 = vmul.f32 %v101, %v173
    %vm177 = vcmask 261121
    %178 = vst.msk [vmem:[#allocation2 - $0x1] sm:$0xfe] %vm177, %v174
    %179 = vst.msk [vmem:[#allocation2 + $0x7] sm:$0xff] %vm44, %v175
    %vm180 = vcmask 253952
    %181 = vst.msk [vmem:[#allocation2 + $0xf] sm:$0x1] %vm180, %v176
    %s182 = scalar_lea.vmem %s0, 24
    %v183 = vld [vmem:[%s182] sm:$0xff]
    %v184 = vld [vmem:[%s182 + $0x8] sm:$0xff]
    %v185 = vld [vmem:[%s182 + $0x10] sm:$0x1]
    %v186 = vpack.c.bf16 %v184, %v183
    %v187 = vpack.c.bf16 %v185, %v185
    %s188 = scalar_lea.vmem %s2, 1
    %v189 = vld [vmem:[%s188] sm:$0x1]
    %v191 = vlaneseq
    %v192 = vshrl.u32 %v191, 7
    %v193 = vsub.s32 0, %v192
    %v194 = vrot.slane %v189, %v193
    %v197 = vsel %vm44, %v186, 0
    %v200 = vsel %vm44, %v187, 0
    %202 = vmatprep.subr.bf16.mxu0 0
    %203 = vmatpush1.bf16.msra.mxu0 %v40
    %204 = vmatprep.subr.bf16.mxu0 0
    %205 = vmatpush1.bf16.msra.mxu0 %v41
    %206 = vmatprep.subr.bf16.mxu0 0
    %207 = vmatpush1.bf16.msra.mxu0 0
    %208 = vmatprep.subr.bf16.mxu0 0
    %209 = vmatpush1.bf16.msra.mxu0 0
    %210 = vmatprep.subr.bf16.mxu0 0
    %211 = vmatpush1.bf16.msra.mxu0 0
    %212 = vmatprep.subr.bf16.mxu0 0
    %213 = vmatpush1.bf16.msra.mxu0 0
    %214 = vmatprep.subr.bf16.mxu0 0
    %215 = vmatpush1.bf16.msra.mxu0 0
    %216 = vmatprep.subr.bf16.mxu0 0
    %217 = vmatpush1.bf16.msra.mxu0 0
    %218 = vmatprep.subr.bf16.mxu0 0
    %219 = vmatpush1.bf16.msra.mxu0 0
    %220 = vmatprep.subr.bf16.mxu0 0
    %221 = vmatpush1.bf16.msra.mxu0 0
    %222 = vmatprep.subr.bf16.mxu0 0
    %223 = vmatpush1.bf16.msra.mxu0 0
    %224 = vmatprep.subr.bf16.mxu0 0
    %225 = vmatpush1.bf16.msra.mxu0 0
    %226 = vmatprep.subr.bf16.mxu0 0
    %227 = vmatpush1.bf16.msra.mxu0 0
    %228 = vmatprep.subr.bf16.mxu0 0
    %229 = vmatpush1.bf16.msra.mxu0 0
    %230 = vmatprep.subr.bf16.mxu0 0
    %231 = vmatpush1.bf16.msra.mxu0 0
    %232 = vmatprep.subr.bf16.mxu0 0
    %233 = vmatpush1.bf16.msra.mxu0 0
    %234 = vmatprep.mubr.bf16.mxu0 0
    %235 = vmatmul.mubr.bf16.gmra.mrb[0].mxu0 %v197
    %v236 = vpop.f32.mrb[0].mxu0
    %v237 = vadd.f32 %v194, %v236
    %v238 = vpop.f32.mrb[0].mxu0
    %v239 = vpop.f32.mrb[0].mxu0
    %v240 = vadd.f32 %v194, %v239
    %v241 = vpop.f32.mrb[0].mxu0
    %242 = vmatprep.mubr.bf16.mxu0 0
    %243 = vmatmul.mubr.bf16.gmra.mrb[0].mxu0 %v200
    %v244 = vpop.f32.mrb[0].mxu0
    %v245 = vadd.f32 %v194, %v244
    %v246 = vpop.f32.mrb[0].mxu0
    %v247 = vpop.f32.mrb[0].mxu0
    %v248 = vpop.f32.mrb[0].mxu0
    %249 = vdwg.mxu0
    %v250 = vmul.f32 %v237, 0.5
    %v251 = vmul.f32 %v240, 0.5
    %v252 = vmul.f32 %v245, 0.5
    %v253 = vmul.f32 %v237, 0.70710677
    %v254 = vmul.f32 %v240, 0.70710677
    %v255 = vmul.f32 %v245, 0.70710677
    %v256 = vand.u32 2147483647, %v253
    %v257 = vand.u32 2147483647, %v254
    %v258 = vand.u32 2147483647, %v255
    %v259 = vmul.f32 %v256, 0.3275911
    %v260 = vmul.f32 %v257, 0.3275911
    %v261 = vmul.f32 %v258, 0.3275911
    %v262 = vadd.f32 %v259, 1.0
    %v263 = vadd.f32 %v260, 1.0
    %v264 = vadd.f32 %v261, 1.0
    %v265 = vrcp.pop %v262
    %v266 = vrcp.pop %v263
    %v267 = vrcp.pop %v264
    %v268 = vmul.f32 %v265, 1.0614054
    %v269 = vmul.f32 %v266, 1.0614054
    %v270 = vmul.f32 %v267, 1.0614054
    %v271 = vadd.f32 %v268, -1.4531521
    %v272 = vadd.f32 %v269, -1.4531521
    %v273 = vadd.f32 %v270, -1.4531521
    %v274 = vmul.f32 %v271, %v265
    %v275 = vmul.f32 %v272, %v266
    %v276 = vmul.f32 %v273, %v267
    %v277 = vadd.f32 %v274, 1.4214138
    %v278 = vadd.f32 %v275, 1.4214138
    %v279 = vadd.f32 %v276, 1.4214138
    %v280 = vmul.f32 %v277, %v265
    %v281 = vmul.f32 %v278, %v266
    %v282 = vmul.f32 %v279, %v267
    %v283 = vadd.f32 %v280, -0.28449672
    %v284 = vadd.f32 %v281, -0.28449672
    %v285 = vadd.f32 %v282, -0.28449672
    %v286 = vmul.f32 %v283, %v265
    %v287 = vmul.f32 %v284, %v266
    %v288 = vmul.f32 %v285, %v267
    %v289 = vadd.f32 %v286, 0.2548296
    %v290 = vadd.f32 %v287, 0.2548296
    %v291 = vadd.f32 %v288, 0.2548296
    %v292 = vmul.f32 %v289, %v265
    %v293 = vmul.f32 %v290, %v266
    %v294 = vmul.f32 %v291, %v267
    %v295 = vmul.f32 %v256, %v256
    %v296 = vmul.f32 %v257, %v257
    %v297 = vmul.f32 %v258, %v258
    %v298 = vsub.f32 0.0, %v295
    %v299 = vsub.f32 0.0, %v296
    %v300 = vsub.f32 0.0, %v297
    %v301 = vmul.f32 %v298, 1.442695
    %v302 = vpow.pop %v301
    %v303 = vmul.f32 %v299, 1.442695
    %v304 = vpow.pop %v303
    %v305 = vmul.f32 %v300, 1.442695
    %v306 = vpow.pop %v305
    %v307 = vmul.f32 %v292, %v302
    %v308 = vmul.f32 %v293, %v304
    %v309 = vmul.f32 %v294, %v306
    %v310 = vsub.f32 1.0, %v307
    %v311 = vsub.f32 1.0, %v308
    %v312 = vsub.f32 1.0, %v309
    %vm313 = vcmp.lt.f32.partialorder %v253, 0.0
    %vm314 = vcmp.lt.f32.partialorder %v254, 0.0
    %vm315 = vcmp.lt.f32.partialorder %v255, 0.0
    %v316 = vsub.f32 0.0, %v310
    %v317 = vsub.f32 0.0, %v311
    %v318 = vsub.f32 0.0, %v312
    %v319 = vsel %vm313, %v316, %v310
    %v320 = vsel %vm314, %v317, %v311
    %v321 = vsel %vm315, %v318, %v312
    %v322 = vadd.f32 %v319, 1.0
    %v323 = vadd.f32 %v320, 1.0
    %v324 = vadd.f32 %v321, 1.0
    %v325 = vmul.f32 %v250, %v322
    %v326 = vmul.f32 %v251, %v323
    %v327 = vmul.f32 %v252, %v324
    %s328 = scalar_lea.vmem [#allocation2], 16
    %329 = vst.msk [vmem:[%s328 - $0x1] sm:$0xfe] %vm177, %v325
    %330 = vst.msk [vmem:[%s328 + $0x7] sm:$0xff] %vm44, %v326
    %331 = vst.msk [vmem:[%s328 + $0xf] sm:$0x1] %vm180, %v327
    // Predicated region
    $region14: #{tpu_custom_call.1} parent=1 // pred_check
      _
    $region15: #{tpu_custom_call.1} parent=1 // pred_check_branch
      %333 = sbr.rel (0) target = $region17
    $region16: #{tpu_custom_call.1} parent=1 // pred_region
      %s335 = ssub.s32 512, 512
      %336 = vsyncadd [#allocation3], %s335
      %s337 = sshll.u32 [#allocation2], 4
      %s338 = int_to_ptr.vmem [resolvable:$true] %s337
      %343 = dma.vmem_to_hbm [thread:$0]  %s338, 512, %s3, [#allocation3], 128, 128, 8
    $region17: #{tpu_custom_call.1} parent=1 // pred_fallthru
      _
    // Predicated region
    $region18: #{tpu_custom_call.1} parent=1 // pred_check
      _
    $region19: #{tpu_custom_call.1} parent=1 // pred_check_branch
      %345 = sbr.rel (0) target = $region21
    $region20: #{tpu_custom_call.1} parent=1 // pred_region
      %346 = dma.done [#allocation3], 512
    $region21: #{tpu_custom_call.1} parent=1 // pred_fallthru
      _
    %347 = vsyncpa [#allocation3], 1

</llo_original>
